<compile_context>
chip_gen: v7x
topology: tpu7x:2x2x1
jax: 0.10.0
libtpu: 0.0.40
codegen_flags: <defaults>
</compile_context>

<pallas_src>
import numpy as np
import jax
import jax.numpy as jnp
from jax.experimental import pallas as pl
from jax.experimental.pallas import tpu as pltpu


# ----------------------- fixed synthesized configuration --------------------
NUM_INPUTS = 3                         # input channels
INPUT_HW = 4                           # input spatial size (4x4)
NODES_EVERY_LAYER = [8, 8, 16, 16]     # [cnn0, cnn1, fc_after_cnn, gcn]
MAXPOOL_MASK = [True, True]
NUM_OUTPUTS = 5
BN_EPS = 1e-5

LANE = 128                             # TPU lane width; per-layer feature pad
CONV_COLS = 4 * LANE                   # conv matmul cols: 4 pool members x 128
# column layout of the packed 128-row weight slab (all slices lane-aligned)
WS_W1 = slice(0 * LANE, 4 * LANE)      # conv1 structured matrix (128, 512)
WS_FC = slice(4 * LANE, 5 * LANE)      # fc_after_cnn            (128, 128)
WS_G = slice(5 * LANE, 6 * LANE)       # GCNConv lin             (128, 128)
WS_O = slice(6 * LANE, 7 * LANE)       # fc_after_gnn            (128, 128)
WSLAB_COLS = 7 * LANE


# ------------------------------ fused kernel --------------------------------
def _net_kernel(x_ref, adj_ref, w0_ref, wslab_ref, bias_ref, out_ref):
    """One row tile (bt whole batches x A agents) of the whole Net.forward.

    x_ref    : (rows, H*W*Cin) bf16   channels-last flattened agent images
    adj_ref  : (rows, rows)    bf16   block-diag, gcn_norm-normalized adjacency
    w0_ref   : (48, 512)       bf16   conv0 (+bias+BN folded), pool-lane layout
    wslab_ref: (128, 896)      bf16   [conv1 | fc_after_cnn | gcn | fc_after_gnn]
    bias_ref : (8, 512)        f32    [t0; t1; bfc; bg; bo] (zero padded)
    out_ref  : (rows, 128)     f32    lane-dense output, real outputs in [0,5)
    """
    f32 = jnp.float32
    bf16 = jnp.bfloat16

    # biases / BN shifts (kept f32; added after the f32 accumulation)
    t0 = bias_ref[0:1, :]                  # conv0 shift, (1, 512)
    t1 = bias_ref[1:2, :]                  # conv1 shift, (1, 512)
    bfc = bias_ref[2:3, 0:LANE]            # fc_after_cnn bias (padded to 128)
    bg = bias_ref[3:4, 0:LANE]             # gcn bias
    bo = bias_ref[4:5, 0:LANE]             # fc_after_gnn bias

    def conv_bn_relu_pool(h, w, t):
        # Conv2d(3x3,pad=1)+bias+BatchNorm(eval) pre-lowered to one matmul +
        # shift.  Each pool member owns its own 128-lane block, so MaxPool2d(2)
        # is an elementwise max of 4 lane-aligned chunks (pure VPU work).
        y = jnp.dot(h, w, preferred_element_type=f32) + t
        y = jnp.maximum(y, 0.0)
        return jnp.maximum(
            jnp.maximum(y[:, 0 * LANE:1 * LANE], y[:, 1 * LANE:2 * LANE]),
            jnp.maximum(y[:, 2 * LANE:3 * LANE], y[:, 3 * LANE:4 * LANE]))

    h = conv_bn_relu_pool(x_ref[...], w0_ref[...], t0)                 # (R,128)
    h = conv_bn_relu_pool(h.astype(bf16), wslab_ref[:, WS_W1], t1)     # (R,128)

    # dense after CNN (+ ReLU); real features live in lanes [0, 16)
    feat = jnp.maximum(
        jnp.dot(h.astype(bf16), wslab_ref[:, WS_FC],
                preferred_element_type=f32) + bfc, 0.0)

    # GCN: X@W then per-batch aggregation with the host-normalized adjacency
    xw = jnp.dot(feat.astype(bf16), wslab_ref[:, WS_G],
                 preferred_element_type=f32)
    agg = jnp.dot(adj_ref[...], xw.astype(bf16), preferred_element_type=f32)
    g = jnp.maximum(agg + bg, 0.0)

    # dense after GNN (last layer: no ReLU); unmasked lane-dense store
    out_ref[...] = jnp.dot(g.astype(bf16), wslab_ref[:, WS_O],
                           preferred_element_type=f32) + bo


# ------------------------------ parameters ----------------------------------
def init_params(key):
    """Raw parameters in torch layout (source for kernel operands + reference)."""
    keys = iter(jax.random.split(key, 24))
    raw = {"cnn": []}
    cin = NUM_INPUTS
    for i in range(len(MAXPOOL_MASK)):
        cout = NODES_EVERY_LAYER[i]
        raw["cnn"].append({
            "w": jax.random.normal(next(keys), (cout, cin, 3, 3), jnp.float32) * 0.2,
            "b": jax.random.normal(next(keys), (cout,), jnp.float32) * 0.1,
            "gamma": 1.0 + 0.1 * jax.random.normal(next(keys), (cout,), jnp.float32),
            "beta": 0.1 * jax.random.normal(next(keys), (cout,), jnp.float32),
            "mean": 0.1 * jax.random.normal(next(keys), (cout,), jnp.float32),
            "var": jnp.abs(jax.random.normal(next(keys), (cout,), jnp.float32)) + 0.5,
            "maxpool": MAXPOOL_MASK[i],
        })
        cin = cout
    raw["fc_after_cnn"] = {
        "w": jax.random.normal(next(keys),
                               (NODES_EVERY_LAYER[2], NODES_EVERY_LAYER[1]),
                               jnp.float32) * 0.2,
        "b": jax.random.normal(next(keys), (NODES_EVERY_LAYER[2],), jnp.float32) * 0.1,
    }
    raw["gcn"] = {
        "w": jax.random.normal(next(keys),
                               (NODES_EVERY_LAYER[3], NODES_EVERY_LAYER[2]),
                               jnp.float32) * 0.2,
        "b": jax.random.normal(next(keys), (NODES_EVERY_LAYER[3],), jnp.float32) * 0.1,
    }
    raw["fc_after_gnn"] = {
        "w": jax.random.normal(next(keys),
                               (NUM_OUTPUTS, NODES_EVERY_LAYER[3]), jnp.float32) * 0.2,
        "b": jax.random.normal(next(keys), (NUM_OUTPUTS,), jnp.float32) * 0.1,
    }
    return raw


def _conv_pool_matrix(cp, hi, wi, in_rows, lane_pad):
    """Lower Conv2d(3x3,pad=1) + bias + BatchNorm(eval) into one dense matrix
    plus an additive shift row.

    Output column of (pool member k, pooled pos p, channel c) = k*lane_pad +
    p*cout + c: each pool-member block is zero-padded to `lane_pad` lanes so
    MaxPool2d(2) is an elementwise max of 4 lane-aligned chunks in the kernel.
    Input rows are channels-last flattened (y*wi + x)*cin + c, zero-padded to
    `in_rows`; zero padding of the conv is folded in (OOB taps drop out)."""
    w = np.asarray(cp["w"], np.float32)                    # (cout, cin, 3, 3)
    cout, cin = w.shape[0], w.shape[1]
    scale = np.asarray(cp["gamma"], np.float32) / np.sqrt(
        np.asarray(cp["var"], np.float32) + BN_EPS)
    shift = np.asarray(cp["beta"], np.float32) + scale * (
        np.asarray(cp["b"], np.float32) - np.asarray(cp["mean"], np.float32))
    w_scaled = w * scale[:, None, None, None]              # fold eval-BN scale
    hp, wp = hi // 2, wi // 2                              # pooled spatial
    assert hi * wi * cin <= in_rows and hp * wp * cout <= lane_pad
    big = np.zeros((in_rows, 4 * lane_pad), np.float32)
    tvec = np.zeros((4 * lane_pad,), np.float32)
    for py in range(hp):
        for px in range(wp):
            p = py * wp + px
            for i in range(2):
                for j in range(2):
                    k = i * 2 + j
                    y, x = 2 * py + i, 2 * px + j          # conv output pixel
                    c0 = k * lane_pad + p * cout
                    tvec[c0:c0 + cout] = shift
                    for ky in range(3):
                        yi = y + ky - 1
                        if yi < 0 or yi >= hi:
                            continue
                        for kx in range(3):
                            xi = x + kx - 1
                            if xi < 0 or xi >= wi:
                                continue
                            r0 = (yi * wi + xi) * cin
                            big[r0:r0 + cin, c0:c0 + cout] = w_scaled[:, :, ky, kx].T
    return big, tvec


def prepare_kernel_params(raw):
    """Pack everything into 3 operands: w0 (bf16), wslab (bf16), bias (f32)."""
    hw = INPUT_HW
    w0, t0 = _conv_pool_matrix(raw["cnn"][0], hw, hw,
                               in_rows=hw * hw * NUM_INPUTS, lane_pad=LANE)
    hw //= 2
    w1, t1 = _conv_pool_matrix(raw["cnn"][1], hw, hw, in_rows=LANE, lane_pad=LANE)

    def pad_t(w_torch, rows, cols):
        # torch Linear weight (out, in) -> zero-padded (in_pad, out_pad)
        wt = np.asarray(w_torch, np.float32).T
        out = np.zeros((rows, cols), np.float32)
        out[:wt.shape[0], :wt.shape[1]] = wt
        return out

    wfc = pad_t(raw["fc_after_cnn"]["w"], LANE, LANE)
    wg = pad_t(raw["gcn"]["w"], LANE, LANE)
    wo = pad_t(raw["fc_after_gnn"]["w"], LANE, LANE)
    wslab = np.concatenate([w1, wfc, wg, wo], axis=1)      # (128, 896)
    assert wslab.shape == (LANE, WSLAB_COLS)

    def padvec(v, n):
        out = np.zeros((n,), np.float32)
        v = np.asarray(v, np.float32)
        out[:v.shape[0]] = v
        return out

    bias = np.zeros((8, CONV_COLS), np.float32)            # (8, 512), 8-sublane
    bias[0] = t0
    bias[1] = t1
    bias[2, :LANE] = padvec(raw["fc_after_cnn"]["b"], LANE)
    bias[3, :LANE] = padvec(raw["gcn"]["b"], LANE)
    bias[4, :LANE] = padvec(raw["fc_after_gnn"]["b"], LANE)

    return {
        "w0": jnp.asarray(w0, jnp.bfloat16),
        "wslab": jnp.asarray(wslab, jnp.bfloat16),
        "bias": jnp.asarray(bias, jnp.float32),
    }


# ------------------------------- forward ------------------------------------
@jax.jit
def net_forward(kparams, x, gso):
    """x: (B, A, C, H, W) f32 (NCHW per agent); gso: (B, A, A) f32.
    Returns (B, A, NUM_OUTPUTS); out[:, a, :] == torch `actions[a]`."""
    B, A, C, H, W = x.shape

    # row tile = bt whole batches (bt*A rows), multiple of 8, ~128 rows (MXU)
    bt = max(1, -(-128 // A))
    while (bt * A) % 8:
        bt += 1
    row_tile = bt * A
    Bp = -(-B // bt) * bt
    if Bp != B:
        x = jnp.pad(x, ((0, Bp - B), (0, 0), (0, 0), (0, 0), (0, 0)))
        gso = jnp.pad(gso, ((0, Bp - B), (0, 0), (0, 0)))
    n = Bp * A
    num_tiles = Bp // bt

    # channels-last flatten; bf16 matmul inputs (native MXU dtype, half DMA)
    x2d = jnp.transpose(x, (0, 1, 3, 4, 2)).reshape(n, H * W * C)
    x2d = x2d.astype(jnp.bfloat16)

    # PyG gcn_norm folded on the host: A_hat = gso + I, deg = column sums,
    # adj = D^-1/2 A_hat^T D^-1/2 per batch, then per-tile block-diagonal
    # so the kernel does one (rows,rows)@(rows,128) aggregation per tile.
    eye_a = jnp.eye(A, dtype=jnp.float32)
    a_hat = gso + eye_a
    deg = jnp.sum(a_hat, axis=1)
    dinv = jnp.where(deg > 0.0, 1.0 / jnp.sqrt(deg), 0.0)
    adjn = dinv[:, :, None] * jnp.swapaxes(a_hat, 1, 2) * dinv[:, None, :]
    a4 = adjn.reshape(num_tiles, bt, A, A)
    eye_bt = jnp.eye(bt, dtype=jnp.float32)
    adjblk = jnp.einsum("pq,tpij->tpiqj", eye_bt, a4)
    adjblk = adjblk.reshape(num_tiles, row_tile, row_tile).astype(jnp.bfloat16)

    out = pl.pallas_call(
        _net_kernel,
        out_shape=jax.ShapeDtypeStruct((n, LANE), jnp.float32),
        grid_spec=pltpu.PrefetchScalarGridSpec(
            num_scalar_prefetch=0,
            grid=(num_tiles,),
            in_specs=[
                pl.BlockSpec((row_tile, H * W * C), lambda i: (i, 0)),
                pl.BlockSpec((None, row_tile, row_tile), lambda i: (i, 0, 0)),
                pl.BlockSpec(kparams["w0"].shape, lambda i: (0, 0)),
                pl.BlockSpec(kparams["wslab"].shape, lambda i: (0, 0)),
                pl.BlockSpec(kparams["bias"].shape, lambda i: (0, 0)),
            ],
            out_specs=pl.BlockSpec((row_tile, LANE), lambda i: (i, 0)),
        ),
        compiler_params=pltpu.CompilerParams(
            dimension_semantics=("parallel",),       # v7x: split tiles over TCs
            vmem_limit_bytes=32 * 1024 * 1024,       # explicit, fits all gens
        ),
    )(x2d, adjblk, kparams["w0"], kparams["wslab"], kparams["bias"])

    return out.reshape(Bp, A, LANE)[:B, :, :NUM_OUTPUTS]


# ----------------------- pure-JAX reference (checking) -----------------------
def reference_forward(raw, x, gso):
    """Pure-JAX (f32, HIGHEST precision) mirror of the torch module."""
    prec = jax.lax.Precision.HIGHEST
    B, A, C, H, W = x.shape
    h = x.reshape(B * A, C, H, W)
    for cp in raw["cnn"]:
        h = jax.lax.conv_general_dilated(
            h, cp["w"], window_strides=(1, 1), padding=((1, 1), (1, 1)),
            dimension_numbers=("NCHW", "OIHW", "NCHW"), precision=prec)
        h = h + cp["b"][None, :, None, None]
        h = (h - cp["mean"][None, :, None, None]) * (
            cp["gamma"][None, :, None, None]
            / jnp.sqrt(cp["var"][None, :, None, None] + BN_EPS)
        ) + cp["beta"][None, :, None, None]
        h = jnp.maximum(h, 0.0)
        if cp["maxpool"]:
            n_, c_, hh, ww = h.shape
            h = h.reshape(n_, c_, hh // 2, 2, ww // 2, 2).max(axis=(3, 5))
    feat = h.reshape(B * A, -1)                  # NCHW flatten (spatial is 1x1)
    feat = jnp.maximum(
        jnp.dot(feat, raw["fc_after_cnn"]["w"].T, precision=prec)
        + raw["fc_after_cnn"]["b"], 0.0)
    ext = feat.reshape(B, A, -1)
    eye_a = jnp.eye(A, dtype=jnp.float32)
    a_hat = gso + eye_a
    deg = a_hat.sum(axis=1)                      # per-batch column degrees
    dinv = jnp.where(deg > 0, 1.0 / jnp.sqrt(deg), 0.0)
    adj = dinv[:, :, None] * jnp.swapaxes(a_hat, 1, 2) * dinv[:, None, :]
    xw = jnp.einsum("baf,gf->bag", ext, raw["gcn"]["w"], precision=prec)
    g = jnp.maximum(jnp.einsum("bij,bjf->bif", adj, xw, precision=prec)
                    + raw["gcn"]["b"], 0.0)
    g = g.reshape(B * A, -1)
    y = jnp.dot(g, raw["fc_after_gnn"]["w"].T, precision=prec) + raw["fc_after_gnn"]["b"]
    return y.reshape(B, A, NUM_OUTPUTS)


# --------------------------------- main --------------------------------------
if __name__ == "__main__":
    key = jax.random.PRNGKey(0)
    kx, kg, kparam = jax.random.split(key, 3)

    # Batched so the row dimension fills MXU tiles: B*A = 256 rows -> two
    # 128-row tiles (grid=(2,), "parallel"); each image stays tiny (3x4x4).
    B, A = 64, 4
    x = jax.random.normal(kx, (B, A, NUM_INPUTS, INPUT_HW, INPUT_HW), jnp.float32)
    r = jax.random.uniform(kg, (B, A, A), jnp.float32)
    gso = 0.5 * (r + jnp.swapaxes(r, 1, 2))                   # symmetric GSO
    gso = gso * (1.0 - jnp.eye(A, dtype=jnp.float32)[None])   # zero diagonal

    raw = init_params(kparam)
    kparams = prepare_kernel_params(raw)

    actions = net_forward(kparams, x, gso)                    # ONE fused Pallas call
    actions = jax.block_until_ready(actions)

    assert actions.shape == (B, A, NUM_OUTPUTS)
    assert bool(jnp.all(jnp.isfinite(actions)))

    # semantics check against the f32 HIGHEST-precision reference; tolerance is
    # loose only to absorb the intentional bf16 MXU operands.
    ref = reference_forward(raw, x, gso)
    np.testing.assert_allclose(np.asarray(actions), np.asarray(ref),
                               rtol=2e-2, atol=2e-2)
    print("KERNEL_OK")
</pallas_src>

<mosaic_0001>
module attributes {stable_mosaic.version = 11 : i64} {
  func.func @_net_kernel(%arg0: i32, %arg1: memref<128x48xbf16, #tpu.memory_space<vmem>>, %arg2: memref<1x128x128xbf16, #tpu.memory_space<vmem>>, %arg3: memref<48x512xbf16, #tpu.memory_space<vmem>>, %arg4: memref<128x896xbf16, #tpu.memory_space<vmem>>, %arg5: memref<8x512xf32, #tpu.memory_space<vmem>>, %arg6: memref<128x128xf32, #tpu.memory_space<vmem>>) attributes {dimension_semantics = [#tpu.dimension_semantics<parallel>], iteration_bounds = array<i64: 2>, scalar_prefetch = 0 : i64, scratch_operands = 0 : i64, tpu.core_type = #tpu.core_type<tc>, window_params = [{transform_indices = @transform_0, window_bounds = array<i64: 128, 48>}, {transform_indices = @transform_1, window_bounds = array<i64: 1, 128, 128>}, {pipeline_mode = #tpu.pipeline_mode<synchronous>, transform_indices = @transform_2, window_bounds = array<i64: 48, 512>}, {pipeline_mode = #tpu.pipeline_mode<synchronous>, transform_indices = @transform_3, window_bounds = array<i64: 128, 896>}, {pipeline_mode = #tpu.pipeline_mode<synchronous>, transform_indices = @transform_4, window_bounds = array<i64: 8, 512>}, {transform_indices = @transform_5, window_bounds = array<i64: 128, 128>}]} {
    %c0 = arith.constant 0 : index
    %c0_0 = arith.constant 0 : index
    %0 = vector.load %arg5[%c0, %c0_0] : memref<8x512xf32, #tpu.memory_space<vmem>>, vector<1x512xf32>
    %c1 = arith.constant 1 : index
    %c0_1 = arith.constant 0 : index
    %1 = vector.load %arg5[%c1, %c0_1] : memref<8x512xf32, #tpu.memory_space<vmem>>, vector<1x512xf32>
    %c2 = arith.constant 2 : index
    %c0_2 = arith.constant 0 : index
    %2 = vector.load %arg5[%c2, %c0_2] : memref<8x512xf32, #tpu.memory_space<vmem>>, vector<1x128xf32>
    %c3 = arith.constant 3 : index
    %c0_3 = arith.constant 0 : index
    %3 = vector.load %arg5[%c3, %c0_3] : memref<8x512xf32, #tpu.memory_space<vmem>>, vector<1x128xf32>
    %c4 = arith.constant 4 : index
    %c0_4 = arith.constant 0 : index
    %4 = vector.load %arg5[%c4, %c0_4] : memref<8x512xf32, #tpu.memory_space<vmem>>, vector<1x128xf32>
    %c0_5 = arith.constant 0 : index
    %c0_6 = arith.constant 0 : index
    %5 = vector.load %arg1[%c0_5, %c0_6] : memref<128x48xbf16, #tpu.memory_space<vmem>>, vector<128x48xbf16>
    %c0_7 = arith.constant 0 : index
    %c0_8 = arith.constant 0 : index
    %6 = vector.load %arg3[%c0_7, %c0_8] : memref<48x512xbf16, #tpu.memory_space<vmem>>, vector<48x512xbf16>
    %cst = arith.constant dense<0.000000e+00> : vector<128x512xf32>
    %7 = tpu.matmul %5, %6, %cst {dimension_numbers = #tpu.dot_dimension_numbers<[1], [0], [0], [1], [0, 0, 1, 1], [], []>} : vector<128x48xbf16>, vector<48x512xbf16>, vector<128x512xf32> -> vector<128x512xf32>
    %8 = vector.broadcast %0 : vector<1x512xf32> to vector<128x512xf32>
    %9 = arith.addf %7, %8 : vector<128x512xf32>
    %cst_9 = arith.constant 0.000000e+00 : f32
    %10 = vector.broadcast %cst_9 : f32 to vector<128x512xf32>
    %11 = arith.maximumf %9, %10 : vector<128x512xf32>
    %12 = vector.extract_strided_slice %11 {offsets = [0, 0], sizes = [128, 128], strides = [1, 1]} : vector<128x512xf32> to vector<128x128xf32>
    %13 = vector.extract_strided_slice %11 {offsets = [0, 128], sizes = [128, 128], strides = [1, 1]} : vector<128x512xf32> to vector<128x128xf32>
    %14 = arith.maximumf %12, %13 : vector<128x128xf32>
    %15 = vector.extract_strided_slice %11 {offsets = [0, 256], sizes = [128, 128], strides = [1, 1]} : vector<128x512xf32> to vector<128x128xf32>
    %16 = vector.extract_strided_slice %11 {offsets = [0, 384], sizes = [128, 128], strides = [1, 1]} : vector<128x512xf32> to vector<128x128xf32>
    %17 = arith.maximumf %15, %16 : vector<128x128xf32>
    %18 = arith.maximumf %14, %17 : vector<128x128xf32>
    %19 = arith.truncf %18 : vector<128x128xf32> to vector<128x128xbf16>
    %c0_10 = arith.constant 0 : index
    %c0_11 = arith.constant 0 : index
    %20 = vector.load %arg4[%c0_10, %c0_11] : memref<128x896xbf16, #tpu.memory_space<vmem>>, vector<128x512xbf16>
    %cst_12 = arith.constant dense<0.000000e+00> : vector<128x512xf32>
    %21 = tpu.matmul %19, %20, %cst_12 {dimension_numbers = #tpu.dot_dimension_numbers<[1], [0], [0], [1], [0, 0, 1, 1], [], []>} : vector<128x128xbf16>, vector<128x512xbf16>, vector<128x512xf32> -> vector<128x512xf32>
    %22 = vector.broadcast %1 : vector<1x512xf32> to vector<128x512xf32>
    %23 = arith.addf %21, %22 : vector<128x512xf32>
    %cst_13 = arith.constant 0.000000e+00 : f32
    %24 = vector.broadcast %cst_13 : f32 to vector<128x512xf32>
    %25 = arith.maximumf %23, %24 : vector<128x512xf32>
    %26 = vector.extract_strided_slice %25 {offsets = [0, 0], sizes = [128, 128], strides = [1, 1]} : vector<128x512xf32> to vector<128x128xf32>
    %27 = vector.extract_strided_slice %25 {offsets = [0, 128], sizes = [128, 128], strides = [1, 1]} : vector<128x512xf32> to vector<128x128xf32>
    %28 = arith.maximumf %26, %27 : vector<128x128xf32>
    %29 = vector.extract_strided_slice %25 {offsets = [0, 256], sizes = [128, 128], strides = [1, 1]} : vector<128x512xf32> to vector<128x128xf32>
    %30 = vector.extract_strided_slice %25 {offsets = [0, 384], sizes = [128, 128], strides = [1, 1]} : vector<128x512xf32> to vector<128x128xf32>
    %31 = arith.maximumf %29, %30 : vector<128x128xf32>
    %32 = arith.maximumf %28, %31 : vector<128x128xf32>
    %33 = arith.truncf %32 : vector<128x128xf32> to vector<128x128xbf16>
    %c0_14 = arith.constant 0 : index
    %c512 = arith.constant 512 : index
    %34 = vector.load %arg4[%c0_14, %c512] : memref<128x896xbf16, #tpu.memory_space<vmem>>, vector<128x128xbf16>
    %cst_15 = arith.constant dense<0.000000e+00> : vector<128x128xf32>
    %35 = tpu.matmul %33, %34, %cst_15 {dimension_numbers = #tpu.dot_dimension_numbers<[1], [0], [0], [1], [0, 0, 1, 1], [], []>} : vector<128x128xbf16>, vector<128x128xbf16>, vector<128x128xf32> -> vector<128x128xf32>
    %36 = vector.broadcast %2 : vector<1x128xf32> to vector<128x128xf32>
    %37 = arith.addf %35, %36 : vector<128x128xf32>
    %cst_16 = arith.constant 0.000000e+00 : f32
    %38 = vector.broadcast %cst_16 : f32 to vector<128x128xf32>
    %39 = arith.maximumf %37, %38 : vector<128x128xf32>
    %40 = arith.truncf %39 : vector<128x128xf32> to vector<128x128xbf16>
    %c0_17 = arith.constant 0 : index
    %c640 = arith.constant 640 : index
    %41 = vector.load %arg4[%c0_17, %c640] : memref<128x896xbf16, #tpu.memory_space<vmem>>, vector<128x128xbf16>
    %cst_18 = arith.constant dense<0.000000e+00> : vector<128x128xf32>
    %42 = tpu.matmul %40, %41, %cst_18 {dimension_numbers = #tpu.dot_dimension_numbers<[1], [0], [0], [1], [0, 0, 1, 1], [], []>} : vector<128x128xbf16>, vector<128x128xbf16>, vector<128x128xf32> -> vector<128x128xf32>
    %c0_19 = arith.constant 0 : index
    %c0_20 = arith.constant 0 : index
    %c0_21 = arith.constant 0 : index
    %43 = vector.load %arg2[%c0_19, %c0_20, %c0_21] : memref<1x128x128xbf16, #tpu.memory_space<vmem>>, vector<1x128x128xbf16>
    %44 = vector.shape_cast %43 : vector<1x128x128xbf16> to vector<128x128xbf16>
    %45 = arith.truncf %42 : vector<128x128xf32> to vector<128x128xbf16>
    %cst_22 = arith.constant dense<0.000000e+00> : vector<128x128xf32>
    %46 = tpu.matmul %44, %45, %cst_22 {dimension_numbers = #tpu.dot_dimension_numbers<[1], [0], [0], [1], [0, 0, 1, 1], [], []>} : vector<128x128xbf16>, vector<128x128xbf16>, vector<128x128xf32> -> vector<128x128xf32>
    %47 = vector.broadcast %3 : vector<1x128xf32> to vector<128x128xf32>
    %48 = arith.addf %46, %47 : vector<128x128xf32>
    %cst_23 = arith.constant 0.000000e+00 : f32
    %49 = vector.broadcast %cst_23 : f32 to vector<128x128xf32>
    %50 = arith.maximumf %48, %49 : vector<128x128xf32>
    %51 = arith.truncf %50 : vector<128x128xf32> to vector<128x128xbf16>
    %c0_24 = arith.constant 0 : index
    %c768 = arith.constant 768 : index
    %52 = vector.load %arg4[%c0_24, %c768] : memref<128x896xbf16, #tpu.memory_space<vmem>>, vector<128x128xbf16>
    %cst_25 = arith.constant dense<0.000000e+00> : vector<128x128xf32>
    %53 = tpu.matmul %51, %52, %cst_25 {dimension_numbers = #tpu.dot_dimension_numbers<[1], [0], [0], [1], [0, 0, 1, 1], [], []>} : vector<128x128xbf16>, vector<128x128xbf16>, vector<128x128xf32> -> vector<128x128xf32>
    %54 = vector.broadcast %4 : vector<1x128xf32> to vector<128x128xf32>
    %55 = arith.addf %53, %54 : vector<128x128xf32>
    %c0_26 = arith.constant 0 : index
    %c0_27 = arith.constant 0 : index
    %56 = vector.load %arg6[%c0_26, %c0_27] : memref<128x128xf32, #tpu.memory_space<vmem>>, vector<128x128xf32>
    tpu.vector_store %arg6[%c0_26, %c0_27], %55 {strides = array<i32>} : memref<128x128xf32, #tpu.memory_space<vmem>>, vector<128x128xf32>,
    return
  }
  func.func @transform_0(%arg0: i32) -> (i32, i32) {
    %c0_i32 = arith.constant 0 : i32
    %c0_i32_0 = arith.constant 0 : i32
    return %arg0, %c0_i32 : i32, i32
  }
  func.func @transform_1(%arg0: i32) -> (i32, i32, i32) {
    %c0_i32 = arith.constant 0 : i32
    %c0_i32_0 = arith.constant 0 : i32
    %c0_i32_1 = arith.constant 0 : i32
    return %arg0, %c0_i32, %c0_i32_0 : i32, i32, i32
  }
  func.func @transform_2(%arg0: i32) -> (i32, i32) {
    %c0_i32 = arith.constant 0 : i32
    %c0_i32_0 = arith.constant 0 : i32
    %c0_i32_1 = arith.constant 0 : i32
    return %c0_i32, %c0_i32_0 : i32, i32
  }
  func.func @transform_3(%arg0: i32) -> (i32, i32) {
    %c0_i32 = arith.constant 0 : i32
    %c0_i32_0 = arith.constant 0 : i32
    %c0_i32_1 = arith.constant 0 : i32
    return %c0_i32, %c0_i32_0 : i32, i32
  }
  func.func @transform_4(%arg0: i32) -> (i32, i32) {
    %c0_i32 = arith.constant 0 : i32
    %c0_i32_0 = arith.constant 0 : i32
    %c0_i32_1 = arith.constant 0 : i32
    return %c0_i32, %c0_i32_0 : i32, i32
  }
  func.func @transform_5(%arg0: i32) -> (i32, i32) {
    %c0_i32 = arith.constant 0 : i32
    %c0_i32_0 = arith.constant 0 : i32
    return %arg0, %c0_i32 : i32, i32
  }
}

</mosaic_0001>

<llo_original>
// kernel: net_forward.1
$region0: #{net_forward.1}
  #allocation0 [shape = 'u32[]', space=smem, size = 0x4, offset = 0x4, fixed_abs, tag = 'smem constant byte address 0x4 - core index']
  #allocation1 [shape = 'u32[144,128]{1,0:T(1,128)}', space=vmem, size = 0x12000, scoped, tag = 'internal scratch']
  %s0 = inlined_call_operand.vmem [shape: bf16[256,48], index: 0, kind: input, shape index: {}]
  %s1 = inlined_call_operand.vmem [shape: bf16[2,128,128], index: 1, kind: input, shape index: {}]
  %s2 = inlined_call_operand.vmem [shape: bf16[48,512], index: 2, kind: input, shape index: {}]
  %s3 = inlined_call_operand.vmem [shape: bf16[128,896], index: 3, kind: input, shape index: {}]
  %s4 = inlined_call_operand.vmem [shape: f32[8,512], index: 4, kind: input, shape index: {}]
  %s5 = inlined_call_operand.vmem [shape: f32[256,128], index: 5, kind: output, shape index: {}]
  %s6 = sld [smem:[#allocation0]]
  $region53: #{net_forward.1} parent=0
    _
  %s8 = ssub.s32 1, %s6
  %s9 = scalar_select 0, %s8, %s6
  loop: start=0, step=1, limit=4
  $region2: #{net_forward.1} parent=0 // loop_pre_header
    _
  $region3: #{net_forward.1} parent=0 // loop_header
    %s11 = sphi 0, %s15
    %p12 = scmp.ge.s32.totalorder %s11, 4
    %s21 = sphi 0, %s23
    %s24 = sphi 0, %s21
    %s25 = sphi 0, %s24
    %s41 = sphi 0, %s25
    %s47 = sphi 0, %s49
    %s50 = sphi 0, %s47
    %s51 = sphi 0, %s50
    %s67 = sphi 0, %s51
    %s71 = sphi 0, %s71
    %s73 = sphi 0, %s71
    %s74 = sphi 0, %s73
    %s88 = sphi 0, %s74
    %s92 = sphi 0, %s92
    %s94 = sphi 0, %s92
    %s95 = sphi 0, %s94
    %s109 = sphi 0, %s95
    %s113 = sphi 0, %s113
    %s115 = sphi 0, %s113
    %s116 = sphi 0, %s115
    %s130 = sphi 0, %s116
    %s136 = sphi 0, %s138
    %s139 = sphi 0, %s136
    %s140 = sphi 0, %s139
    %s156 = sphi 0, %s140
  $region4: #{net_forward.1} parent=0 // loop_header_branch
    %14 = sbr.rel (%p12) target = $region8
  $region5: #{net_forward.1} parent=0 // loop_body
    %s16 = ssub.s32 %s11, 1
    %s17 = ssub.s32 %s11, 2
    %s18 = sadd.s32 %s11, 1
    %s19 = ssub.s32 %s11, %s18
    %p20 = scmp.eq.s32.totalorder %s19, 0
    %s22 = sadd.s32 %s21, 1
    %s23 = scalar_select %p20, %s21, %s22
    %p26 = pneg %p20
    %p27 = scmp.eq.s32.totalorder %s11, 1
    %p28 = por %p26, %p27
    %p29 = scmp.ne.s32.totalorder %s21, %s24
    %p30 = scmp.eq.s32.totalorder %s11, 0
    %p31 = por %p29, %p30
    %p32 = scmp.ne.s32.totalorder %s21, %s24
    %p33 = scmp.eq.s32.totalorder %s16, 1
    %p34 = por %p32, %p33
    %p35 = scmp.ne.s32.totalorder %s24, %s25
    %p36 = scmp.eq.s32.totalorder %s16, 0
    %p37 = por %p35, %p36
    %p38 = scmp.ne.s32.totalorder %s24, %s25
    %p39 = scmp.eq.s32.totalorder %s17, 1
    %p40 = por %p38, %p39
    %p42 = scmp.ne.s32.totalorder %s25, %s41
    %p43 = scmp.eq.s32.totalorder %s17, 0
    %p44 = por %p42, %p43
    %s45 = ssub.s32 %s11, %s18
    %p46 = scmp.eq.s32.totalorder %s45, 0
    %s48 = sadd.s32 %s47, 1
    %s49 = scalar_select %p46, %s47, %s48
    %p52 = pneg %p46
    %p53 = scmp.eq.s32.totalorder %s11, 1
    %p54 = por %p52, %p53
    %p55 = scmp.ne.s32.totalorder %s47, %s50
    %p56 = scmp.eq.s32.totalorder %s11, 0
    %p57 = por %p55, %p56
    %p58 = scmp.ne.s32.totalorder %s47, %s50
    %p59 = scmp.eq.s32.totalorder %s16, 1
    %p60 = por %p58, %p59
    %p61 = scmp.ne.s32.totalorder %s50, %s51
    %p62 = scmp.eq.s32.totalorder %s16, 0
    %p63 = por %p61, %p62
    %p64 = scmp.ne.s32.totalorder %s50, %s51
    %p65 = scmp.eq.s32.totalorder %s17, 1
    %p66 = por %p64, %p65
    %p68 = scmp.ne.s32.totalorder %s51, %s67
    %p69 = scmp.eq.s32.totalorder %s17, 0
    %p70 = por %p68, %p69
    %s72 = sadd.s32 %s71, 1
    %p75 = scmp.eq.s32.totalorder %s11, 1
    %p76 = scmp.ne.s32.totalorder %s71, %s73
    %p77 = scmp.eq.s32.totalorder %s11, 0
    %p78 = por %p76, %p77
    %p79 = scmp.ne.s32.totalorder %s71, %s73
    %p80 = scmp.eq.s32.totalorder %s16, 1
    %p81 = por %p79, %p80
    %p82 = scmp.ne.s32.totalorder %s73, %s74
    %p83 = scmp.eq.s32.totalorder %s16, 0
    %p84 = por %p82, %p83
    %p85 = scmp.ne.s32.totalorder %s73, %s74
    %p86 = scmp.eq.s32.totalorder %s17, 1
    %p87 = por %p85, %p86
    %p89 = scmp.ne.s32.totalorder %s74, %s88
    %p90 = scmp.eq.s32.totalorder %s17, 0
    %p91 = por %p89, %p90
    %s93 = sadd.s32 %s92, 1
    %p96 = scmp.eq.s32.totalorder %s11, 1
    %p97 = scmp.ne.s32.totalorder %s92, %s94
    %p98 = scmp.eq.s32.totalorder %s11, 0
    %p99 = por %p97, %p98
    %p100 = scmp.ne.s32.totalorder %s92, %s94
    %p101 = scmp.eq.s32.totalorder %s16, 1
    %p102 = por %p100, %p101
    %p103 = scmp.ne.s32.totalorder %s94, %s95
    %p104 = scmp.eq.s32.totalorder %s16, 0
    %p105 = por %p103, %p104
    %p106 = scmp.ne.s32.totalorder %s94, %s95
    %p107 = scmp.eq.s32.totalorder %s17, 1
    %p108 = por %p106, %p107
    %p110 = scmp.ne.s32.totalorder %s95, %s109
    %p111 = scmp.eq.s32.totalorder %s17, 0
    %p112 = por %p110, %p111
    %s114 = sadd.s32 %s113, 1
    %p117 = scmp.eq.s32.totalorder %s11, 1
    %p118 = scmp.ne.s32.totalorder %s113, %s115
    %p119 = scmp.eq.s32.totalorder %s11, 0
    %p120 = por %p118, %p119
    %p121 = scmp.ne.s32.totalorder %s113, %s115
    %p122 = scmp.eq.s32.totalorder %s16, 1
    %p123 = por %p121, %p122
    %p124 = scmp.ne.s32.totalorder %s115, %s116
    %p125 = scmp.eq.s32.totalorder %s16, 0
    %p126 = por %p124, %p125
    %p127 = scmp.ne.s32.totalorder %s115, %s116
    %p128 = scmp.eq.s32.totalorder %s17, 1
    %p129 = por %p127, %p128
    %p131 = scmp.ne.s32.totalorder %s116, %s130
    %p132 = scmp.eq.s32.totalorder %s17, 0
    %p133 = por %p131, %p132
    %s134 = ssub.s32 %s11, %s18
    %p135 = scmp.eq.s32.totalorder %s134, 0
    %s137 = sadd.s32 %s136, 1
    %s138 = scalar_select %p135, %s136, %s137
    %p141 = pneg %p135
    %p142 = scmp.eq.s32.totalorder %s11, 1
    %p143 = por %p141, %p142
    %p144 = scmp.ne.s32.totalorder %s136, %s139
    %p145 = scmp.eq.s32.totalorder %s11, 0
    %p146 = por %p144, %p145
    %p147 = scmp.ne.s32.totalorder %s136, %s139
    %p148 = scmp.eq.s32.totalorder %s16, 1
    %p149 = por %p147, %p148
    %p150 = scmp.ne.s32.totalorder %s139, %s140
    %p151 = scmp.eq.s32.totalorder %s16, 0
    %p152 = por %p150, %p151
    %p153 = scmp.ne.s32.totalorder %s139, %s140
    %p154 = scmp.eq.s32.totalorder %s17, 1
    %p155 = por %p153, %p154
    %p157 = scmp.ne.s32.totalorder %s140, %s156
    %p158 = scmp.eq.s32.totalorder %s17, 0
    %p159 = por %p157, %p158
    %p160 = scmp.le.s32.totalorder 1, %s11
    %p161 = scmp.lt.s32.totalorder %s11, 3
    %p162 = pnand %p160, %p161
    %p163 = pneg %p162
    // Predicated region
    $region9: #{net_forward.1} parent=5 // pred_check
      _
    $region10: #{net_forward.1} parent=5 // pred_check_branch
      %165 = sbr.rel (%p162) target = $region12
    $region11: #{net_forward.1} parent=5 // pred_region
      %s166 = ssub.s32 %s11, 1
      // Predicated region
      $region13: #{net_forward.1} parent=11 // pred_check
        %p167 = pneg %p84
      $region14: #{net_forward.1} parent=11 // pred_check_branch
        %169 = sbr.rel (%p167) target = $region16
      $region15: #{net_forward.1} parent=11 // pred_region
        _
      $region16: #{net_forward.1} parent=11 // pred_fallthru
        _
      // Predicated region
      $region17: #{net_forward.1} parent=11 // pred_check
        %p170 = pneg %p105
      $region18: #{net_forward.1} parent=11 // pred_check_branch
        %172 = sbr.rel (%p170) target = $region20
      $region19: #{net_forward.1} parent=11 // pred_region
        _
      $region20: #{net_forward.1} parent=11 // pred_fallthru
        _
      // Predicated region
      $region21: #{net_forward.1} parent=11 // pred_check
        %p173 = pneg %p126
      $region22: #{net_forward.1} parent=11 // pred_check_branch
        %175 = sbr.rel (%p173) target = $region24
      $region23: #{net_forward.1} parent=11 // pred_region
        _
      $region24: #{net_forward.1} parent=11 // pred_fallthru
        _
    $region12: #{net_forward.1} parent=5 // pred_fallthru
      _
    %p176 = scmp.lt.s32.totalorder %s11, 2
    // Predicated region
    $region25: #{net_forward.1} parent=5 // pred_check
      %p177 = pneg %p176
    $region26: #{net_forward.1} parent=5 // pred_check_branch
      %179 = sbr.rel (%p177) target = $region28
    $region27: #{net_forward.1} parent=5 // pred_region
      // Predicated region
      $region29: #{net_forward.1} parent=27 // pred_check
        %p180 = pneg %p31
      $region30: #{net_forward.1} parent=27 // pred_check_branch
        %182 = sbr.rel (%p180) target = $region32
      $region31: #{net_forward.1} parent=27 // pred_region
        %s183 = smul.u32 16, %s11
        %p184 = scmp.lt.s32.totalorder %s183, 31
        %s185 = scalar_select %p184, %s183, 31
        %s186 = smul.addr %s185, 4
        %s187 = scalar_lea.vmem %s0, %s186
        %s188 = smul.u32 16, %s11
      $region32: #{net_forward.1} parent=27 // pred_fallthru
        _
      // Predicated region
      $region33: #{net_forward.1} parent=27 // pred_check
        %p189 = pneg %p57
      $region34: #{net_forward.1} parent=27 // pred_check_branch
        %191 = sbr.rel (%p189) target = $region36
      $region35: #{net_forward.1} parent=27 // pred_region
        %p192 = scmp.lt.s32.totalorder %s11, 1
        %s193 = scalar_select %p192, %s11, 1
        %s194 = smul.addr %s193, 16
        %s195 = smul.addr %s194, 4
        %s196 = scalar_lea.vmem %s1, %s195
      $region36: #{net_forward.1} parent=27 // pred_fallthru
        _
    $region28: #{net_forward.1} parent=5 // pred_fallthru
      _
    %p197 = scmp.le.s32.totalorder 1, %s11
    %p198 = scmp.lt.s32.totalorder %s11, 3
    %p199 = pnand %p197, %p198
    %p200 = pneg %p199
    // Predicated region
    $region37: #{net_forward.1} parent=5 // pred_check
      _
    $region38: #{net_forward.1} parent=5 // pred_check_branch
      %202 = sbr.rel (%p199) target = $region40
    $region39: #{net_forward.1} parent=5 // pred_region
      %s203 = ssub.s32 %s11, 1
      %s204 = smul.u32 16, %s16
      %p205 = scmp.lt.s32.totalorder %s204, 31
      %s206 = scalar_select %p205, %s204, 31
      %s207 = smul.addr %s206, 4
      %s208 = scalar_lea.vmem %s0, %s207
      %p209 = pneg %p37
      %p210 = pneg %p34
      %p211 = scmp.lt.s32.totalorder %s16, 1
      %s212 = scalar_select %p211, %s16, 1
      %s213 = smul.addr %s212, 16
      %s214 = smul.addr %s213, 4
      %s215 = scalar_lea.vmem %s1, %s214
      %p216 = pneg %p63
      %p217 = pneg %p60
      %p218 = pneg %p84
      %p219 = pneg %p81
      %p220 = pneg %p105
      %p221 = pneg %p102
      %p222 = pneg %p126
      %p223 = pneg %p123
      %p224 = pneg %p152
      %p225 = pneg %p149
      %s226 = smul.u32 16, %s16
      %p227 = scmp.lt.s32.totalorder %s226, 31
      %s228 = scalar_select %p227, %s226, 31
      %s229 = smul.addr %s228, 8
      %s230 = scalar_lea.vmem %s5, %s229
      %s231 = smul.u32 16, %s16
      %p232 = scmp.lt.s32.totalorder %s231, 31
      %s233 = scalar_select %p232, %s231, 31
      %s234 = smul.addr %s233, 4
      %s235 = scalar_lea.vmem %s0, %s234
      %s236 = smul.u32 16, %s16
      %p237 = scmp.lt.s32.totalorder %s16, 1
      %s238 = scalar_select %p237, %s16, 1
      %s239 = smul.addr %s238, 16
      %s240 = smul.addr %s239, 4
      %s241 = scalar_lea.vmem %s1, %s240
      %s242 = smul.u32 16, %s16
      %p243 = scmp.lt.s32.totalorder %s242, 31
      %s244 = scalar_select %p243, %s242, 31
      %s245 = smul.addr %s244, 8
      %s246 = scalar_lea.vmem %s5, %s245
      %s247 = smul.u32 16, %s16
      %v249 = vld [vmem:[%s4] ss:$8 sm:$0xf]
      %s250 = scalar_lea.vmem %s4, 1
      %v251 = vld [vmem:[%s250] ss:$8 sm:$0xf]
      %v252 = vld [vmem:[%s4 + $0x2] ss:$0 sm:$0xff]
      %v253 = vld [vmem:[%s4 + $0x3] ss:$0 sm:$0xff]
      %v254 = vld [vmem:[%s4 + $0x4] ss:$0 sm:$0xff]
      %v255 = vld [vmem:[%s235] sm:$0xf]
      %v256 = vld [vmem:[%s235 + $0x4] sm:$0xf]
      %v257 = vld [vmem:[%s235 + $0x8] sm:$0xf]
      %v258 = vld [vmem:[%s235 + $0xc] sm:$0xf]
      %v259 = vld [vmem:[%s235 + $0x10] sm:$0xf]
      %v260 = vld [vmem:[%s235 + $0x14] sm:$0xf]
      %v261 = vld [vmem:[%s235 + $0x18] sm:$0xf]
      %v262 = vld [vmem:[%s235 + $0x1c] sm:$0xf]
      %v263 = vld [vmem:[%s235 + $0x20] sm:$0xf]
      %v264 = vld [vmem:[%s235 + $0x24] sm:$0xf]
      %v265 = vld [vmem:[%s235 + $0x28] sm:$0xf]
      %v266 = vld [vmem:[%s235 + $0x2c] sm:$0xf]
      %v267 = vld [vmem:[%s235 + $0x30] sm:$0xf]
      %v268 = vld [vmem:[%s235 + $0x34] sm:$0xf]
      %v269 = vld [vmem:[%s235 + $0x38] sm:$0xf]
      %v270 = vld [vmem:[%s235 + $0x3c] sm:$0xf]
      %v271 = vld [vmem:[%s2] sm:$0xff]
      %v272 = vld [vmem:[%s2 + $0x8] sm:$0xff]
      %v273 = vld [vmem:[%s2 + $0x10] sm:$0xff]
      %v274 = vld [vmem:[%s2 + $0x18] sm:$0xff]
      %v275 = vld [vmem:[%s2 + $0x20] sm:$0xff]
      %v276 = vld [vmem:[%s2 + $0x28] sm:$0xff]
      %v277 = vld [vmem:[%s2 + $0x30] sm:$0xff]
      %v278 = vld [vmem:[%s2 + $0x38] sm:$0xff]
      %v279 = vld [vmem:[%s2 + $0x40] sm:$0xff]
      %v280 = vld [vmem:[%s2 + $0x48] sm:$0xff]
      %v281 = vld [vmem:[%s2 + $0x50] sm:$0xff]
      %v282 = vld [vmem:[%s2 + $0x58] sm:$0xff]
      %v284 = vlaneseq
      %v285 = vshrl.u32 %v284, 7
      %v286 = vsub.s32 0, %v285
      %v287 = vrot.slane %v249, %v286
      %v288 = vlaneseq
      %v289 = vshrl.u32 %v288, 7
      %v290 = vsub.s32 1, %v289
      %v291 = vrot.slane %v249, %v290
      %v292 = vlaneseq
      %v293 = vshrl.u32 %v292, 7
      %v294 = vsub.s32 2, %v293
      %v295 = vrot.slane %v249, %v294
      %v296 = vlaneseq
      %v297 = vshrl.u32 %v296, 7
      %v298 = vsub.s32 3, %v297
      %v299 = vrot.slane %v249, %v298
      %v320 = vunpack.c.l.b16 %v255
      %v321 = vunpack.c.l.b16 %v256
      %v322 = vunpack.c.l.b16 %v257
      %v323 = vunpack.c.l.b16 %v258
      %v324 = vunpack.c.l.b16 %v259
      %v325 = vunpack.c.l.b16 %v260
      %v326 = vunpack.c.l.b16 %v261
      %v327 = vunpack.c.l.b16 %v262
      %v328 = vunpack.c.l.b16 %v263
      %v329 = vunpack.c.l.b16 %v264
      %v330 = vunpack.c.l.b16 %v265
      %v331 = vunpack.c.l.b16 %v266
      %v332 = vunpack.c.l.b16 %v267
      %v333 = vunpack.c.l.b16 %v268
      %v334 = vunpack.c.l.b16 %v269
      %v335 = vunpack.c.l.b16 %v270
      %v336 = vpack.c.b16 %v321, %v320
      %v337 = vpack.c.b16 %v323, %v322
      %v338 = vpack.c.b16 %v325, %v324
      %v339 = vpack.c.b16 %v327, %v326
      %v340 = vpack.c.b16 %v329, %v328
      %v341 = vpack.c.b16 %v331, %v330
      %v342 = vpack.c.b16 %v333, %v332
      %v343 = vpack.c.b16 %v335, %v334
      %v356 = vunpack.c.l.b16 %v271
      %v357 = vunpack.c.h.b16 %v271
      %v358 = vunpack.c.l.b16 %v272
      %v359 = vunpack.c.h.b16 %v272
      %v360 = vunpack.c.l.b16 %v273
      %v361 = vunpack.c.h.b16 %v273
      %v362 = vunpack.c.l.b16 %v274
      %v363 = vunpack.c.h.b16 %v274
      %v364 = vunpack.c.l.b16 %v275
      %v365 = vunpack.c.h.b16 %v275
      %v366 = vunpack.c.l.b16 %v276
      %v367 = vunpack.c.h.b16 %v276
      %v368 = vunpack.c.l.b16 %v277
      %v369 = vunpack.c.h.b16 %v277
      %v370 = vunpack.c.l.b16 %v278
      %v371 = vunpack.c.h.b16 %v278
      %v372 = vunpack.c.l.b16 %v279
      %v373 = vunpack.c.h.b16 %v279
      %v374 = vunpack.c.l.b16 %v280
      %v375 = vunpack.c.h.b16 %v280
      %v376 = vunpack.c.l.b16 %v281
      %v377 = vunpack.c.h.b16 %v281
      %v378 = vunpack.c.l.b16 %v282
      %v379 = vunpack.c.h.b16 %v282
      %v380 = vpack.c.b16 %v360, %v356
      %v381 = vpack.c.b16 %v361, %v357
      %v382 = vpack.c.b16 %v362, %v358
      %v383 = vpack.c.b16 %v363, %v359
      %v384 = vpack.c.b16 %v368, %v364
      %v385 = vpack.c.b16 %v369, %v365
      %v386 = vpack.c.b16 %v370, %v366
      %v387 = vpack.c.b16 %v371, %v367
      %v388 = vpack.c.b16 %v376, %v372
      %v389 = vpack.c.b16 %v377, %v373
      %v390 = vpack.c.b16 %v378, %v374
      %v391 = vpack.c.b16 %v379, %v375
      %vm404 = vcmask 392192
      %v406 = vsel %vm404, %v336, 0
      %v409 = vsel %vm404, %v337, 0
      %v412 = vsel %vm404, %v338, 0
      %v415 = vsel %vm404, %v339, 0
      %v418 = vsel %vm404, %v340, 0
      %v421 = vsel %vm404, %v341, 0
      %v424 = vsel %vm404, %v342, 0
      %v427 = vsel %vm404, %v343, 0
      %429 = vmatprep.subr.bf16.mxu0 %v381
      %430 = vmatpush1.bf16.msra.mxu0 %v380
      %431 = vmatprep.subr.bf16.mxu0 %v385
      %432 = vmatpush1.bf16.msra.mxu0 %v384
      %433 = vmatprep.subr.bf16.mxu0 %v389
      %434 = vmatpush1.bf16.msra.mxu0 %v388
      %435 = vmatprep.subr.bf16.mxu0 0
      %436 = vmatpush1.bf16.msra.mxu0 0
      %437 = vmatprep.subr.bf16.mxu0 0
      %438 = vmatpush1.bf16.msra.mxu0 0
      %439 = vmatprep.subr.bf16.mxu0 0
      %440 = vmatpush1.bf16.msra.mxu0 0
      %441 = vmatprep.subr.bf16.mxu0 0
      %442 = vmatpush1.bf16.msra.mxu0 0
      %443 = vmatprep.subr.bf16.mxu0 0
      %444 = vmatpush1.bf16.msra.mxu0 0
      %445 = vmatprep.subr.bf16.mxu0 0
      %446 = vmatpush1.bf16.msra.mxu0 0
      %447 = vmatprep.subr.bf16.mxu0 0
      %448 = vmatpush1.bf16.msra.mxu0 0
      %449 = vmatprep.subr.bf16.mxu0 0
      %450 = vmatpush1.bf16.msra.mxu0 0
      %451 = vmatprep.subr.bf16.mxu0 0
      %452 = vmatpush1.bf16.msra.mxu0 0
      %453 = vmatprep.subr.bf16.mxu0 0
      %454 = vmatpush1.bf16.msra.mxu0 0
      %455 = vmatprep.subr.bf16.mxu0 0
      %456 = vmatpush1.bf16.msra.mxu0 0
      %457 = vmatprep.subr.bf16.mxu0 0
      %458 = vmatpush1.bf16.msra.mxu0 0
      %459 = vmatprep.subr.bf16.mxu0 0
      %460 = vmatpush1.bf16.msra.mxu0 0
      %461 = vmatprep.mubr.bf16.mxu0 0
      %462 = vmatmul.mubr.bf16.gmra.mrb[0].mxu0 %v406
      %v463 = vpop.f32.mrb[0].mxu0
      %v464 = vadd.f32 %v287, %v463
      %v465 = vpop.f32.mrb[0].mxu0
      %v466 = vadd.f32 %v291, %v465
      %v467 = vpop.f32.mrb[0].mxu0
      %v468 = vadd.f32 %v287, %v467
      %v469 = vpop.f32.mrb[0].mxu0
      %v470 = vadd.f32 %v291, %v469
      %471 = vmatprep.mubr.bf16.mxu0 0
      %472 = vmatmul.mubr.bf16.gmra.mrb[0].mxu0 %v409
      %v473 = vpop.f32.mrb[0].mxu0
      %v474 = vadd.f32 %v287, %v473
      %v475 = vpop.f32.mrb[0].mxu0
      %v476 = vadd.f32 %v291, %v475
      %v477 = vpop.f32.mrb[0].mxu0
      %v478 = vadd.f32 %v287, %v477
      %v479 = vpop.f32.mrb[0].mxu0
      %v480 = vadd.f32 %v291, %v479
      %481 = vmatprep.mubr.bf16.mxu0 0
      %482 = vmatmul.mubr.bf16.gmra.mrb[0].mxu0 %v412
      %v483 = vpop.f32.mrb[0].mxu0
      %v484 = vadd.f32 %v287, %v483
      %v485 = vpop.f32.mrb[0].mxu0
      %v486 = vadd.f32 %v291, %v485
      %v487 = vpop.f32.mrb[0].mxu0
      %v488 = vadd.f32 %v287, %v487
      %v489 = vpop.f32.mrb[0].mxu0
      %v490 = vadd.f32 %v291, %v489
      %491 = vmatprep.mubr.bf16.mxu0 0
      %492 = vmatmul.mubr.bf16.gmra.mrb[0].mxu0 %v415
      %v493 = vpop.f32.mrb[0].mxu0
      %v494 = vadd.f32 %v287, %v493
      %v495 = vpop.f32.mrb[0].mxu0
      %v496 = vadd.f32 %v291, %v495
      %v497 = vpop.f32.mrb[0].mxu0
      %v498 = vadd.f32 %v287, %v497
      %v499 = vpop.f32.mrb[0].mxu0
      %v500 = vadd.f32 %v291, %v499
      %501 = vmatprep.mubr.bf16.mxu0 0
      %502 = vmatmul.mubr.bf16.gmra.mrb[0].mxu0 %v418
      %v503 = vpop.f32.mrb[0].mxu0
      %v504 = vadd.f32 %v287, %v503
      %v505 = vpop.f32.mrb[0].mxu0
      %v506 = vadd.f32 %v291, %v505
      %v507 = vpop.f32.mrb[0].mxu0
      %v508 = vadd.f32 %v287, %v507
      %v509 = vpop.f32.mrb[0].mxu0
      %v510 = vadd.f32 %v291, %v509
      %511 = vmatprep.mubr.bf16.mxu0 0
      %512 = vmatmul.mubr.bf16.gmra.mrb[0].mxu0 %v421
      %v513 = vpop.f32.mrb[0].mxu0
      %v514 = vadd.f32 %v287, %v513
      %v515 = vpop.f32.mrb[0].mxu0
      %v516 = vadd.f32 %v291, %v515
      %v517 = vpop.f32.mrb[0].mxu0
      %v518 = vadd.f32 %v287, %v517
      %v519 = vpop.f32.mrb[0].mxu0
      %v520 = vadd.f32 %v291, %v519
      %521 = vmatprep.mubr.bf16.mxu0 0
      %522 = vmatmul.mubr.bf16.gmra.mrb[0].mxu0 %v424
      %v523 = vpop.f32.mrb[0].mxu0
      %v524 = vadd.f32 %v287, %v523
      %v525 = vpop.f32.mrb[0].mxu0
      %v526 = vadd.f32 %v291, %v525
      %v527 = vpop.f32.mrb[0].mxu0
      %v528 = vadd.f32 %v287, %v527
      %v529 = vpop.f32.mrb[0].mxu0
      %v530 = vadd.f32 %v291, %v529
      %531 = vmatprep.mubr.bf16.mxu0 0
      %532 = vmatmul.mubr.bf16.gmra.mrb[0].mxu0 %v427
      %v533 = vpop.f32.mrb[0].mxu0
      %v534 = vadd.f32 %v287, %v533
      %v535 = vpop.f32.mrb[0].mxu0
      %v536 = vadd.f32 %v291, %v535
      %v537 = vpop.f32.mrb[0].mxu0
      %v538 = vadd.f32 %v287, %v537
      %v539 = vpop.f32.mrb[0].mxu0
      %v540 = vadd.f32 %v291, %v539
      %541 = vdwg.mxu0
      %542 = vmatprep.subr.bf16.mxu0 %v383
      %543 = vmatpush1.bf16.msra.mxu0 %v382
      %544 = vmatprep.subr.bf16.mxu0 %v387
      %545 = vmatpush1.bf16.msra.mxu0 %v386
      %546 = vmatprep.subr.bf16.mxu0 %v391
      %547 = vmatpush1.bf16.msra.mxu0 %v390
      %548 = vmatprep.subr.bf16.mxu0 0
      %549 = vmatpush1.bf16.msra.mxu0 0
      %550 = vmatprep.subr.bf16.mxu0 0
      %551 = vmatpush1.bf16.msra.mxu0 0
      %552 = vmatprep.subr.bf16.mxu0 0
      %553 = vmatpush1.bf16.msra.mxu0 0
      %554 = vmatprep.subr.bf16.mxu0 0
      %555 = vmatpush1.bf16.msra.mxu0 0
      %556 = vmatprep.subr.bf16.mxu0 0
      %557 = vmatpush1.bf16.msra.mxu0 0
      %558 = vmatprep.subr.bf16.mxu0 0
      %559 = vmatpush1.bf16.msra.mxu0 0
      %560 = vmatprep.subr.bf16.mxu0 0
      %561 = vmatpush1.bf16.msra.mxu0 0
      %562 = vmatprep.subr.bf16.mxu0 0
      %563 = vmatpush1.bf16.msra.mxu0 0
      %564 = vmatprep.subr.bf16.mxu0 0
      %565 = vmatpush1.bf16.msra.mxu0 0
      %566 = vmatprep.subr.bf16.mxu0 0
      %567 = vmatpush1.bf16.msra.mxu0 0
      %568 = vmatprep.subr.bf16.mxu0 0
      %569 = vmatpush1.bf16.msra.mxu0 0
      %570 = vmatprep.subr.bf16.mxu0 0
      %571 = vmatpush1.bf16.msra.mxu0 0
      %572 = vmatprep.subr.bf16.mxu0 0
      %573 = vmatpush1.bf16.msra.mxu0 0
      %574 = vmatprep.mubr.bf16.mxu0 0
      %575 = vmatmul.mubr.bf16.gmra.mrb[0].mxu0 %v406
      %v576 = vpop.f32.mrb[0].mxu0
      %v577 = vadd.f32 %v295, %v576
      %v578 = vpop.f32.mrb[0].mxu0
      %v579 = vadd.f32 %v299, %v578
      %v580 = vpop.f32.mrb[0].mxu0
      %v581 = vadd.f32 %v295, %v580
      %v582 = vpop.f32.mrb[0].mxu0
      %v583 = vadd.f32 %v299, %v582
      %584 = vmatprep.mubr.bf16.mxu0 0
      %585 = vmatmul.mubr.bf16.gmra.mrb[0].mxu0 %v409
      %v586 = vpop.f32.mrb[0].mxu0
      %v587 = vadd.f32 %v295, %v586
      %v588 = vpop.f32.mrb[0].mxu0
      %v589 = vadd.f32 %v299, %v588
      %v590 = vpop.f32.mrb[0].mxu0
      %v591 = vadd.f32 %v295, %v590
      %v592 = vpop.f32.mrb[0].mxu0
      %v593 = vadd.f32 %v299, %v592
      %594 = vmatprep.mubr.bf16.mxu0 0
      %595 = vmatmul.mubr.bf16.gmra.mrb[0].mxu0 %v412
      %v596 = vpop.f32.mrb[0].mxu0
      %v597 = vadd.f32 %v295, %v596
      %v598 = vpop.f32.mrb[0].mxu0
      %v599 = vadd.f32 %v299, %v598
      %v600 = vpop.f32.mrb[0].mxu0
      %v601 = vadd.f32 %v295, %v600
      %v602 = vpop.f32.mrb[0].mxu0
      %v603 = vadd.f32 %v299, %v602
      %604 = vmatprep.mubr.bf16.mxu0 0
      %605 = vmatmul.mubr.bf16.gmra.mrb[0].mxu0 %v415
      %v606 = vpop.f32.mrb[0].mxu0
      %v607 = vadd.f32 %v295, %v606
      %v608 = vpop.f32.mrb[0].mxu0
      %v609 = vadd.f32 %v299, %v608
      %v610 = vpop.f32.mrb[0].mxu0
      %v611 = vadd.f32 %v295, %v610
      %v612 = vpop.f32.mrb[0].mxu0
      %v613 = vadd.f32 %v299, %v612
      %614 = vmatprep.mubr.bf16.mxu0 0
      %615 = vmatmul.mubr.bf16.gmra.mrb[0].mxu0 %v418
      %v616 = vpop.f32.mrb[0].mxu0
      %v617 = vadd.f32 %v295, %v616
      %v618 = vpop.f32.mrb[0].mxu0
      %v619 = vadd.f32 %v299, %v618
      %v620 = vpop.f32.mrb[0].mxu0
      %v621 = vadd.f32 %v295, %v620
      %v622 = vpop.f32.mrb[0].mxu0
      %v623 = vadd.f32 %v299, %v622
      %624 = vmatprep.mubr.bf16.mxu0 0
      %625 = vmatmul.mubr.bf16.gmra.mrb[0].mxu0 %v421
      %v626 = vpop.f32.mrb[0].mxu0
      %v627 = vadd.f32 %v295, %v626
      %v628 = vpop.f32.mrb[0].mxu0
      %v629 = vadd.f32 %v299, %v628
      %v630 = vpop.f32.mrb[0].mxu0
      %v631 = vadd.f32 %v295, %v630
      %v632 = vpop.f32.mrb[0].mxu0
      %v633 = vadd.f32 %v299, %v632
      %634 = vmatprep.mubr.bf16.mxu0 0
      %635 = vmatmul.mubr.bf16.gmra.mrb[0].mxu0 %v424
      %v636 = vpop.f32.mrb[0].mxu0
      %v637 = vadd.f32 %v295, %v636
      %v638 = vpop.f32.mrb[0].mxu0
      %v639 = vadd.f32 %v299, %v638
      %v640 = vpop.f32.mrb[0].mxu0
      %v641 = vadd.f32 %v295, %v640
      %v642 = vpop.f32.mrb[0].mxu0
      %v643 = vadd.f32 %v299, %v642
      %644 = vmatprep.mubr.bf16.mxu0 0
      %645 = vmatmul.mubr.bf16.gmra.mrb[0].mxu0 %v427
      %v646 = vpop.f32.mrb[0].mxu0
      %v647 = vadd.f32 %v295, %v646
      %v648 = vpop.f32.mrb[0].mxu0
      %v649 = vadd.f32 %v299, %v648
      %v650 = vpop.f32.mrb[0].mxu0
      %v651 = vadd.f32 %v295, %v650
      %v652 = vpop.f32.mrb[0].mxu0
      %v653 = vadd.f32 %v299, %v652
      %654 = vdwg.mxu0
      %v655 = vmax.f32 %v464, 0.0
      %v656 = vmax.f32 %v466, 0.0
      %v657 = vmax.f32 %v577, 0.0
      %v658 = vmax.f32 %v579, 0.0
      %v659 = vmax.f32 %v468, 0.0
      %v660 = vmax.f32 %v470, 0.0
      %v661 = vmax.f32 %v581, 0.0
      %v662 = vmax.f32 %v583, 0.0
      %v663 = vmax.f32 %v474, 0.0
      %v664 = vmax.f32 %v476, 0.0
      %v665 = vmax.f32 %v587, 0.0
      %v666 = vmax.f32 %v589, 0.0
      %v667 = vmax.f32 %v478, 0.0
      %v668 = vmax.f32 %v480, 0.0
      %v669 = vmax.f32 %v591, 0.0
      %v670 = vmax.f32 %v593, 0.0
      %v671 = vmax.f32 %v484, 0.0
      %v672 = vmax.f32 %v486, 0.0
      %v673 = vmax.f32 %v597, 0.0
      %v674 = vmax.f32 %v599, 0.0
      %v675 = vmax.f32 %v488, 0.0
      %v676 = vmax.f32 %v490, 0.0
      %v677 = vmax.f32 %v601, 0.0
      %v678 = vmax.f32 %v603, 0.0
      %v679 = vmax.f32 %v494, 0.0
      %v680 = vmax.f32 %v496, 0.0
      %v681 = vmax.f32 %v607, 0.0
      %v682 = vmax.f32 %v609, 0.0
      %v683 = vmax.f32 %v498, 0.0
      %v684 = vmax.f32 %v500, 0.0
      %v685 = vmax.f32 %v611, 0.0
      %v686 = vmax.f32 %v613, 0.0
      %v687 = vmax.f32 %v504, 0.0
      %v688 = vmax.f32 %v506, 0.0
      %v689 = vmax.f32 %v617, 0.0
      %v690 = vmax.f32 %v619, 0.0
      %v691 = vmax.f32 %v508, 0.0
      %v692 = vmax.f32 %v510, 0.0
      %v693 = vmax.f32 %v621, 0.0
      %v694 = vmax.f32 %v623, 0.0
      %v695 = vmax.f32 %v514, 0.0
      %v696 = vmax.f32 %v516, 0.0
      %v697 = vmax.f32 %v627, 0.0
      %v698 = vmax.f32 %v629, 0.0
      %v699 = vmax.f32 %v518, 0.0
      %v700 = vmax.f32 %v520, 0.0
      %v701 = vmax.f32 %v631, 0.0
      %v702 = vmax.f32 %v633, 0.0
      %v703 = vmax.f32 %v524, 0.0
      %v704 = vmax.f32 %v526, 0.0
      %v705 = vmax.f32 %v637, 0.0
      %v706 = vmax.f32 %v639, 0.0
      %v707 = vmax.f32 %v528, 0.0
      %v708 = vmax.f32 %v530, 0.0
      %v709 = vmax.f32 %v641, 0.0
      %v710 = vmax.f32 %v643, 0.0
      %v711 = vmax.f32 %v534, 0.0
      %v712 = vmax.f32 %v536, 0.0
      %v713 = vmax.f32 %v647, 0.0
      %v714 = vmax.f32 %v649, 0.0
      %v715 = vmax.f32 %v538, 0.0
      %v716 = vmax.f32 %v540, 0.0
      %v717 = vmax.f32 %v651, 0.0
      %v718 = vmax.f32 %v653, 0.0
      %v719 = vmax.f32 %v655, %v656
      %v720 = vmax.f32 %v659, %v660
      %v721 = vmax.f32 %v663, %v664
      %v722 = vmax.f32 %v667, %v668
      %v723 = vmax.f32 %v671, %v672
      %v724 = vmax.f32 %v675, %v676
      %v725 = vmax.f32 %v679, %v680
      %v726 = vmax.f32 %v683, %v684
      %v727 = vmax.f32 %v687, %v688
      %v728 = vmax.f32 %v691, %v692
      %v729 = vmax.f32 %v695, %v696
      %v730 = vmax.f32 %v699, %v700
      %v731 = vmax.f32 %v703, %v704
      %v732 = vmax.f32 %v707, %v708
      %v733 = vmax.f32 %v711, %v712
      %v734 = vmax.f32 %v715, %v716
      %v735 = vmax.f32 %v657, %v658
      %v736 = vmax.f32 %v661, %v662
      %v737 = vmax.f32 %v665, %v666
      %v738 = vmax.f32 %v669, %v670
      %v739 = vmax.f32 %v673, %v674
      %v740 = vmax.f32 %v677, %v678
      %v741 = vmax.f32 %v681, %v682
      %v742 = vmax.f32 %v685, %v686
      %v743 = vmax.f32 %v689, %v690
      %v744 = vmax.f32 %v693, %v694
      %v745 = vmax.f32 %v697, %v698
      %v746 = vmax.f32 %v701, %v702
      %v747 = vmax.f32 %v705, %v706
      %v748 = vmax.f32 %v709, %v710
      %v749 = vmax.f32 %v713, %v714
      %v750 = vmax.f32 %v717, %v718
      %v751 = vmax.f32 %v719, %v735
      %v752 = vmax.f32 %v720, %v736
      %v753 = vmax.f32 %v721, %v737
      %v754 = vmax.f32 %v722, %v738
      %v755 = vmax.f32 %v723, %v739
      %v756 = vmax.f32 %v724, %v740
      %v757 = vmax.f32 %v725, %v741
      %v758 = vmax.f32 %v726, %v742
      %v759 = vmax.f32 %v727, %v743
      %v760 = vmax.f32 %v728, %v744
      %v761 = vmax.f32 %v729, %v745
      %v762 = vmax.f32 %v730, %v746
      %v763 = vmax.f32 %v731, %v747
      %v764 = vmax.f32 %v732, %v748
      %v765 = vmax.f32 %v733, %v749
      %v766 = vmax.f32 %v734, %v750
      %v767 = vpack.c.bf16 %v752, %v751
      %v768 = vpack.c.bf16 %v754, %v753
      %v769 = vpack.c.bf16 %v756, %v755
      %v770 = vpack.c.bf16 %v758, %v757
      %v771 = vpack.c.bf16 %v760, %v759
      %v772 = vpack.c.bf16 %v762, %v761
      %v773 = vpack.c.bf16 %v764, %v763
      %v774 = vpack.c.bf16 %v766, %v765
      %v775 = vld [vmem:[%s3] sm:$0xff]
      %v776 = vld [vmem:[%s3 + $0x8] sm:$0xff]
      %v777 = vld [vmem:[%s3 + $0x1c] sm:$0xff]
      %v778 = vld [vmem:[%s3 + $0x24] sm:$0xff]
      %v779 = vld [vmem:[%s3 + $0x38] sm:$0xff]
      %v780 = vld [vmem:[%s3 + $0x40] sm:$0xff]
      %v781 = vld [vmem:[%s3 + $0x54] sm:$0xff]
      %v782 = vld [vmem:[%s3 + $0x5c] sm:$0xff]
      %v783 = vld [vmem:[%s3 + $0x70] sm:$0xff]
      %v784 = vld [vmem:[%s3 + $0x78] sm:$0xff]
      %v785 = vld [vmem:[%s3 + $0x8c] sm:$0xff]
      %v786 = vld [vmem:[%s3 + $0x94] sm:$0xff]
      %v787 = vld [vmem:[%s3 + $0xa8] sm:$0xff]
      %v788 = vld [vmem:[%s3 + $0xb0] sm:$0xff]
      %v789 = vld [vmem:[%s3 + $0xc4] sm:$0xff]
      %v790 = vld [vmem:[%s3 + $0xcc] sm:$0xff]
      %v791 = vld [vmem:[%s3 + $0xe0] sm:$0xff]
      %v792 = vld [vmem:[%s3 + $0xe8] sm:$0xff]
      %v793 = vld [vmem:[%s3 + $0xfc] sm:$0xff]
      %v794 = vld [vmem:[%s3 + $0x104] sm:$0xff]
      %v795 = vld [vmem:[%s3 + $0x118] sm:$0xff]
      %v796 = vld [vmem:[%s3 + $0x120] sm:$0xff]
      %v797 = vld [vmem:[%s3 + $0x134] sm:$0xff]
      %v798 = vld [vmem:[%s3 + $0x13c] sm:$0xff]
      %v799 = vld [vmem:[%s3 + $0x150] sm:$0xff]
      %v800 = vld [vmem:[%s3 + $0x158] sm:$0xff]
      %v801 = vld [vmem:[%s3 + $0x16c] sm:$0xff]
      %v802 = vld [vmem:[%s3 + $0x174] sm:$0xff]
      %v803 = vld [vmem:[%s3 + $0x188] sm:$0xff]
      %v804 = vld [vmem:[%s3 + $0x190] sm:$0xff]
      %v805 = vld [vmem:[%s3 + $0x1a4] sm:$0xff]
      %v806 = vld [vmem:[%s3 + $0x1ac] sm:$0xff]
      %v808 = vlaneseq
      %v809 = vshrl.u32 %v808, 7
      %v810 = vsub.s32 0, %v809
      %v811 = vrot.slane %v251, %v810
      %v812 = vlaneseq
      %v813 = vshrl.u32 %v812, 7
      %v814 = vsub.s32 1, %v813
      %v815 = vrot.slane %v251, %v814
      %v816 = vlaneseq
      %v817 = vshrl.u32 %v816, 7
      %v818 = vsub.s32 2, %v817
      %v819 = vrot.slane %v251, %v818
      %v820 = vlaneseq
      %v821 = vshrl.u32 %v820, 7
      %v822 = vsub.s32 3, %v821
      %v823 = vrot.slane %v251, %v822
      %v860 = vunpack.c.l.b16 %v775
      %v861 = vunpack.c.h.b16 %v775
      %v862 = vunpack.c.l.b16 %v776
      %v863 = vunpack.c.h.b16 %v776
      %v864 = vunpack.c.l.b16 %v777
      %v865 = vunpack.c.h.b16 %v777
      %v866 = vunpack.c.l.b16 %v778
      %v867 = vunpack.c.h.b16 %v778
      %v868 = vunpack.c.l.b16 %v779
      %v869 = vunpack.c.h.b16 %v779
      %v870 = vunpack.c.l.b16 %v780
      %v871 = vunpack.c.h.b16 %v780
      %v872 = vunpack.c.l.b16 %v781
      %v873 = vunpack.c.h.b16 %v781
      %v874 = vunpack.c.l.b16 %v782
      %v875 = vunpack.c.h.b16 %v782
      %v876 = vunpack.c.l.b16 %v783
      %v877 = vunpack.c.h.b16 %v783
      %v878 = vunpack.c.l.b16 %v784
      %v879 = vunpack.c.h.b16 %v784
      %v880 = vunpack.c.l.b16 %v785
      %v881 = vunpack.c.h.b16 %v785
      %v882 = vunpack.c.l.b16 %v786
      %v883 = vunpack.c.h.b16 %v786
      %v884 = vunpack.c.l.b16 %v787
      %v885 = vunpack.c.h.b16 %v787
      %v886 = vunpack.c.l.b16 %v788
      %v887 = vunpack.c.h.b16 %v788
      %v888 = vunpack.c.l.b16 %v789
      %v889 = vunpack.c.h.b16 %v789
      %v890 = vunpack.c.l.b16 %v790
      %v891 = vunpack.c.h.b16 %v790
      %v892 = vunpack.c.l.b16 %v791
      %v893 = vunpack.c.h.b16 %v791
      %v894 = vunpack.c.l.b16 %v792
      %v895 = vunpack.c.h.b16 %v792
      %v896 = vunpack.c.l.b16 %v793
      %v897 = vunpack.c.h.b16 %v793
      %v898 = vunpack.c.l.b16 %v794
      %v899 = vunpack.c.h.b16 %v794
      %v900 = vunpack.c.l.b16 %v795
      %v901 = vunpack.c.h.b16 %v795
      %v902 = vunpack.c.l.b16 %v796
      %v903 = vunpack.c.h.b16 %v796
      %v904 = vunpack.c.l.b16 %v797
      %v905 = vunpack.c.h.b16 %v797
      %v906 = vunpack.c.l.b16 %v798
      %v907 = vunpack.c.h.b16 %v798
      %v908 = vunpack.c.l.b16 %v799
      %v909 = vunpack.c.h.b16 %v799
      %v910 = vunpack.c.l.b16 %v800
      %v911 = vunpack.c.h.b16 %v800
      %v912 = vunpack.c.l.b16 %v801
      %v913 = vunpack.c.h.b16 %v801
      %v914 = vunpack.c.l.b16 %v802
      %v915 = vunpack.c.h.b16 %v802
      %v916 = vunpack.c.l.b16 %v803
      %v917 = vunpack.c.h.b16 %v803
      %v918 = vunpack.c.l.b16 %v804
      %v919 = vunpack.c.h.b16 %v804
      %v920 = vunpack.c.l.b16 %v805
      %v921 = vunpack.c.h.b16 %v805
      %v922 = vunpack.c.l.b16 %v806
      %v923 = vunpack.c.h.b16 %v806
      %v924 = vpack.c.b16 %v864, %v860
      %v925 = vpack.c.b16 %v865, %v861
      %v926 = vpack.c.b16 %v866, %v862
      %v927 = vpack.c.b16 %v867, %v863
      %v928 = vpack.c.b16 %v872, %v868
      %v929 = vpack.c.b16 %v873, %v869
      %v930 = vpack.c.b16 %v874, %v870
      %v931 = vpack.c.b16 %v875, %v871
      %v932 = vpack.c.b16 %v880, %v876
      %v933 = vpack.c.b16 %v881, %v877
      %v934 = vpack.c.b16 %v882, %v878
      %v935 = vpack.c.b16 %v883, %v879
      %v936 = vpack.c.b16 %v888, %v884
      %v937 = vpack.c.b16 %v889, %v885
      %v938 = vpack.c.b16 %v890, %v886
      %v939 = vpack.c.b16 %v891, %v887
      %v940 = vpack.c.b16 %v896, %v892
      %v941 = vpack.c.b16 %v897, %v893
      %v942 = vpack.c.b16 %v898, %v894
      %v943 = vpack.c.b16 %v899, %v895
      %v944 = vpack.c.b16 %v904, %v900
      %v945 = vpack.c.b16 %v905, %v901
      %v946 = vpack.c.b16 %v906, %v902
      %v947 = vpack.c.b16 %v907, %v903
      %v948 = vpack.c.b16 %v912, %v908
      %v949 = vpack.c.b16 %v913, %v909
      %v950 = vpack.c.b16 %v914, %v910
      %v951 = vpack.c.b16 %v915, %v911
      %v952 = vpack.c.b16 %v920, %v916
      %v953 = vpack.c.b16 %v921, %v917
      %v954 = vpack.c.b16 %v922, %v918
      %v955 = vpack.c.b16 %v923, %v919
      %988 = vmatprep.subr.bf16.mxu0 %v925
      %989 = vmatpush1.bf16.msra.mxu0 %v924
      %990 = vmatprep.subr.bf16.mxu0 %v929
      %991 = vmatpush1.bf16.msra.mxu0 %v928
      %992 = vmatprep.subr.bf16.mxu0 %v933
      %993 = vmatpush1.bf16.msra.mxu0 %v932
      %994 = vmatprep.subr.bf16.mxu0 %v937
      %995 = vmatpush1.bf16.msra.mxu0 %v936
      %996 = vmatprep.subr.bf16.mxu0 %v941
      %997 = vmatpush1.bf16.msra.mxu0 %v940
      %998 = vmatprep.subr.bf16.mxu0 %v945
      %999 = vmatpush1.bf16.msra.mxu0 %v944
      %1000 = vmatprep.subr.bf16.mxu0 %v949
      %1001 = vmatpush1.bf16.msra.mxu0 %v948
      %1002 = vmatprep.subr.bf16.mxu0 %v953
      %1003 = vmatpush1.bf16.msra.mxu0 %v952
      %1004 = vmatprep.subr.bf16.mxu0 0
      %1005 = vmatpush1.bf16.msra.mxu0 0
      %1006 = vmatprep.subr.bf16.mxu0 0
      %1007 = vmatpush1.bf16.msra.mxu0 0
      %1008 = vmatprep.subr.bf16.mxu0 0
      %1009 = vmatpush1.bf16.msra.mxu0 0
      %1010 = vmatprep.subr.bf16.mxu0 0
      %1011 = vmatpush1.bf16.msra.mxu0 0
      %1012 = vmatprep.subr.bf16.mxu0 0
      %1013 = vmatpush1.bf16.msra.mxu0 0
      %1014 = vmatprep.subr.bf16.mxu0 0
      %1015 = vmatpush1.bf16.msra.mxu0 0
      %1016 = vmatprep.subr.bf16.mxu0 0
      %1017 = vmatpush1.bf16.msra.mxu0 0
      %1018 = vmatprep.subr.bf16.mxu0 0
      %1019 = vmatpush1.bf16.msra.mxu0 0
      %1020 = vmatprep.mubr.bf16.mxu0 0
      %1021 = vmatmul.mubr.bf16.gmra.mrb[0].mxu0 %v767
      %v1022 = vpop.f32.mrb[0].mxu0
      %v1023 = vadd.f32 %v811, %v1022
      %v1024 = vpop.f32.mrb[0].mxu0
      %v1025 = vadd.f32 %v815, %v1024
      %v1026 = vpop.f32.mrb[0].mxu0
      %v1027 = vadd.f32 %v811, %v1026
      %v1028 = vpop.f32.mrb[0].mxu0
      %v1029 = vadd.f32 %v815, %v1028
      %1030 = vmatprep.mubr.bf16.mxu0 0
      %1031 = vmatmul.mubr.bf16.gmra.mrb[0].mxu0 %v768
      %v1032 = vpop.f32.mrb[0].mxu0
      %v1033 = vadd.f32 %v811, %v1032
      %v1034 = vpop.f32.mrb[0].mxu0
      %v1035 = vadd.f32 %v815, %v1034
      %v1036 = vpop.f32.mrb[0].mxu0
      %v1037 = vadd.f32 %v811, %v1036
      %v1038 = vpop.f32.mrb[0].mxu0
      %v1039 = vadd.f32 %v815, %v1038
      %1040 = vmatprep.mubr.bf16.mxu0 0
      %1041 = vmatmul.mubr.bf16.gmra.mrb[0].mxu0 %v769
      %v1042 = vpop.f32.mrb[0].mxu0
      %v1043 = vadd.f32 %v811, %v1042
      %v1044 = vpop.f32.mrb[0].mxu0
      %v1045 = vadd.f32 %v815, %v1044
      %v1046 = vpop.f32.mrb[0].mxu0
      %v1047 = vadd.f32 %v811, %v1046
      %v1048 = vpop.f32.mrb[0].mxu0
      %v1049 = vadd.f32 %v815, %v1048
      %1050 = vmatprep.mubr.bf16.mxu0 0
      %1051 = vmatmul.mubr.bf16.gmra.mrb[0].mxu0 %v770
      %v1052 = vpop.f32.mrb[0].mxu0
      %v1053 = vadd.f32 %v811, %v1052
      %v1054 = vpop.f32.mrb[0].mxu0
      %v1055 = vadd.f32 %v815, %v1054
      %v1056 = vpop.f32.mrb[0].mxu0
      %v1057 = vadd.f32 %v811, %v1056
      %v1058 = vpop.f32.mrb[0].mxu0
      %v1059 = vadd.f32 %v815, %v1058
      %1060 = vmatprep.mubr.bf16.mxu0 0
      %1061 = vmatmul.mubr.bf16.gmra.mrb[0].mxu0 %v771
      %v1062 = vpop.f32.mrb[0].mxu0
      %v1063 = vadd.f32 %v811, %v1062
      %v1064 = vpop.f32.mrb[0].mxu0
      %v1065 = vadd.f32 %v815, %v1064
      %v1066 = vpop.f32.mrb[0].mxu0
      %v1067 = vadd.f32 %v811, %v1066
      %v1068 = vpop.f32.mrb[0].mxu0
      %v1069 = vadd.f32 %v815, %v1068
      %1070 = vmatprep.mubr.bf16.mxu0 0
      %1071 = vmatmul.mubr.bf16.gmra.mrb[0].mxu0 %v772
      %v1072 = vpop.f32.mrb[0].mxu0
      %v1073 = vadd.f32 %v811, %v1072
      %v1074 = vpop.f32.mrb[0].mxu0
      %v1075 = vadd.f32 %v815, %v1074
      %v1076 = vpop.f32.mrb[0].mxu0
      %v1077 = vadd.f32 %v811, %v1076
      %v1078 = vpop.f32.mrb[0].mxu0
      %v1079 = vadd.f32 %v815, %v1078
      %1080 = vmatprep.mubr.bf16.mxu0 0
      %1081 = vmatmul.mubr.bf16.gmra.mrb[0].mxu0 %v773
      %v1082 = vpop.f32.mrb[0].mxu0
      %v1083 = vadd.f32 %v811, %v1082
      %v1084 = vpop.f32.mrb[0].mxu0
      %v1085 = vadd.f32 %v815, %v1084
      %v1086 = vpop.f32.mrb[0].mxu0
      %v1087 = vadd.f32 %v811, %v1086
      %v1088 = vpop.f32.mrb[0].mxu0
      %v1089 = vadd.f32 %v815, %v1088
      %1090 = vmatprep.mubr.bf16.mxu0 0
      %1091 = vmatmul.mubr.bf16.gmra.mrb[0].mxu0 %v774
      %v1092 = vpop.f32.mrb[0].mxu0
      %v1093 = vadd.f32 %v811, %v1092
      %v1094 = vpop.f32.mrb[0].mxu0
      %v1095 = vadd.f32 %v815, %v1094
      %v1096 = vpop.f32.mrb[0].mxu0
      %v1097 = vadd.f32 %v811, %v1096
      %v1098 = vpop.f32.mrb[0].mxu0
      %v1099 = vadd.f32 %v815, %v1098
      %1100 = vdwg.mxu0
      %1101 = vmatprep.subr.bf16.mxu0 %v927
      %1102 = vmatpush1.bf16.msra.mxu0 %v926
      %1103 = vmatprep.subr.bf16.mxu0 %v931
      %1104 = vmatpush1.bf16.msra.mxu0 %v930
      %1105 = vmatprep.subr.bf16.mxu0 %v935
      %1106 = vmatpush1.bf16.msra.mxu0 %v934
      %1107 = vmatprep.subr.bf16.mxu0 %v939
      %1108 = vmatpush1.bf16.msra.mxu0 %v938
      %1109 = vmatprep.subr.bf16.mxu0 %v943
      %1110 = vmatpush1.bf16.msra.mxu0 %v942
      %1111 = vmatprep.subr.bf16.mxu0 %v947
      %1112 = vmatpush1.bf16.msra.mxu0 %v946
      %1113 = vmatprep.subr.bf16.mxu0 %v951
      %1114 = vmatpush1.bf16.msra.mxu0 %v950
      %1115 = vmatprep.subr.bf16.mxu0 %v955
      %1116 = vmatpush1.bf16.msra.mxu0 %v954
      %1117 = vmatprep.subr.bf16.mxu0 0
      %1118 = vmatpush1.bf16.msra.mxu0 0
      %1119 = vmatprep.subr.bf16.mxu0 0
      %1120 = vmatpush1.bf16.msra.mxu0 0
      %1121 = vmatprep.subr.bf16.mxu0 0
      %1122 = vmatpush1.bf16.msra.mxu0 0
      %1123 = vmatprep.subr.bf16.mxu0 0
      %1124 = vmatpush1.bf16.msra.mxu0 0
      %1125 = vmatprep.subr.bf16.mxu0 0
      %1126 = vmatpush1.bf16.msra.mxu0 0
      %1127 = vmatprep.subr.bf16.mxu0 0
      %1128 = vmatpush1.bf16.msra.mxu0 0
      %1129 = vmatprep.subr.bf16.mxu0 0
      %1130 = vmatpush1.bf16.msra.mxu0 0
      %1131 = vmatprep.subr.bf16.mxu0 0
      %1132 = vmatpush1.bf16.msra.mxu0 0
      %1133 = vmatprep.mubr.bf16.mxu0 0
      %1134 = vmatmul.mubr.bf16.gmra.mrb[0].mxu0 %v767
      %v1135 = vpop.f32.mrb[0].mxu0
      %v1136 = vadd.f32 %v819, %v1135
      %v1137 = vpop.f32.mrb[0].mxu0
      %v1138 = vadd.f32 %v823, %v1137
      %v1139 = vpop.f32.mrb[0].mxu0
      %v1140 = vadd.f32 %v819, %v1139
      %v1141 = vpop.f32.mrb[0].mxu0
      %v1142 = vadd.f32 %v823, %v1141
      %1143 = vmatprep.mubr.bf16.mxu0 0
      %1144 = vmatmul.mubr.bf16.gmra.mrb[0].mxu0 %v768
      %v1145 = vpop.f32.mrb[0].mxu0
      %v1146 = vadd.f32 %v819, %v1145
      %v1147 = vpop.f32.mrb[0].mxu0
      %v1148 = vadd.f32 %v823, %v1147
      %v1149 = vpop.f32.mrb[0].mxu0
      %v1150 = vadd.f32 %v819, %v1149
      %v1151 = vpop.f32.mrb[0].mxu0
      %v1152 = vadd.f32 %v823, %v1151
      %1153 = vmatprep.mubr.bf16.mxu0 0
      %1154 = vmatmul.mubr.bf16.gmra.mrb[0].mxu0 %v769
      %v1155 = vpop.f32.mrb[0].mxu0
      %v1156 = vadd.f32 %v819, %v1155
      %v1157 = vpop.f32.mrb[0].mxu0
      %v1158 = vadd.f32 %v823, %v1157
      %v1159 = vpop.f32.mrb[0].mxu0
      %v1160 = vadd.f32 %v819, %v1159
      %v1161 = vpop.f32.mrb[0].mxu0
      %v1162 = vadd.f32 %v823, %v1161
      %1163 = vmatprep.mubr.bf16.mxu0 0
      %1164 = vmatmul.mubr.bf16.gmra.mrb[0].mxu0 %v770
      %v1165 = vpop.f32.mrb[0].mxu0
      %v1166 = vadd.f32 %v819, %v1165
      %v1167 = vpop.f32.mrb[0].mxu0
      %v1168 = vadd.f32 %v823, %v1167
      %v1169 = vpop.f32.mrb[0].mxu0
      %v1170 = vadd.f32 %v819, %v1169
      %v1171 = vpop.f32.mrb[0].mxu0
      %v1172 = vadd.f32 %v823, %v1171
      %1173 = vmatprep.mubr.bf16.mxu0 0
      %1174 = vmatmul.mubr.bf16.gmra.mrb[0].mxu0 %v771
      %v1175 = vpop.f32.mrb[0].mxu0
      %v1176 = vadd.f32 %v819, %v1175
      %v1177 = vpop.f32.mrb[0].mxu0
      %v1178 = vadd.f32 %v823, %v1177
      %v1179 = vpop.f32.mrb[0].mxu0
      %v1180 = vadd.f32 %v819, %v1179
      %v1181 = vpop.f32.mrb[0].mxu0
      %v1182 = vadd.f32 %v823, %v1181
      %1183 = vmatprep.mubr.bf16.mxu0 0
      %1184 = vmatmul.mubr.bf16.gmra.mrb[0].mxu0 %v772
      %v1185 = vpop.f32.mrb[0].mxu0
      %v1186 = vadd.f32 %v819, %v1185
      %v1187 = vpop.f32.mrb[0].mxu0
      %v1188 = vadd.f32 %v823, %v1187
      %v1189 = vpop.f32.mrb[0].mxu0
      %v1190 = vadd.f32 %v819, %v1189
      %v1191 = vpop.f32.mrb[0].mxu0
      %v1192 = vadd.f32 %v823, %v1191
      %1193 = vmatprep.mubr.bf16.mxu0 0
      %1194 = vmatmul.mubr.bf16.gmra.mrb[0].mxu0 %v773
      %v1195 = vpop.f32.mrb[0].mxu0
      %v1196 = vadd.f32 %v819, %v1195
      %v1197 = vpop.f32.mrb[0].mxu0
      %v1198 = vadd.f32 %v823, %v1197
      %v1199 = vpop.f32.mrb[0].mxu0
      %v1200 = vadd.f32 %v819, %v1199
      %v1201 = vpop.f32.mrb[0].mxu0
      %v1202 = vadd.f32 %v823, %v1201
      %1203 = vmatprep.mubr.bf16.mxu0 0
      %1204 = vmatmul.mubr.bf16.gmra.mrb[0].mxu0 %v774
      %v1205 = vpop.f32.mrb[0].mxu0
      %v1206 = vadd.f32 %v819, %v1205
      %v1207 = vpop.f32.mrb[0].mxu0
      %v1208 = vadd.f32 %v823, %v1207
      %v1209 = vpop.f32.mrb[0].mxu0
      %v1210 = vadd.f32 %v819, %v1209
      %v1211 = vpop.f32.mrb[0].mxu0
      %v1212 = vadd.f32 %v823, %v1211
      %1213 = vdwg.mxu0
      %v1214 = vmax.f32 %v1023, 0.0
      %v1215 = vmax.f32 %v1025, 0.0
      %v1216 = vmax.f32 %v1136, 0.0
      %v1217 = vmax.f32 %v1138, 0.0
      %v1218 = vmax.f32 %v1027, 0.0
      %v1219 = vmax.f32 %v1029, 0.0
      %v1220 = vmax.f32 %v1140, 0.0
      %v1221 = vmax.f32 %v1142, 0.0
      %v1222 = vmax.f32 %v1033, 0.0
      %v1223 = vmax.f32 %v1035, 0.0
      %v1224 = vmax.f32 %v1146, 0.0
      %v1225 = vmax.f32 %v1148, 0.0
      %v1226 = vmax.f32 %v1037, 0.0
      %v1227 = vmax.f32 %v1039, 0.0
      %v1228 = vmax.f32 %v1150, 0.0
      %v1229 = vmax.f32 %v1152, 0.0
      %v1230 = vmax.f32 %v1043, 0.0
      %v1231 = vmax.f32 %v1045, 0.0
      %v1232 = vmax.f32 %v1156, 0.0
      %v1233 = vmax.f32 %v1158, 0.0
      %v1234 = vmax.f32 %v1047, 0.0
      %v1235 = vmax.f32 %v1049, 0.0
      %v1236 = vmax.f32 %v1160, 0.0
      %v1237 = vmax.f32 %v1162, 0.0
      %v1238 = vmax.f32 %v1053, 0.0
      %v1239 = vmax.f32 %v1055, 0.0
      %v1240 = vmax.f32 %v1166, 0.0
      %v1241 = vmax.f32 %v1168, 0.0
      %v1242 = vmax.f32 %v1057, 0.0
      %v1243 = vmax.f32 %v1059, 0.0
      %v1244 = vmax.f32 %v1170, 0.0
      %v1245 = vmax.f32 %v1172, 0.0
      %v1246 = vmax.f32 %v1063, 0.0
      %v1247 = vmax.f32 %v1065, 0.0
      %v1248 = vmax.f32 %v1176, 0.0
      %v1249 = vmax.f32 %v1178, 0.0
      %v1250 = vmax.f32 %v1067, 0.0
      %v1251 = vmax.f32 %v1069, 0.0
      %v1252 = vmax.f32 %v1180, 0.0
      %v1253 = vmax.f32 %v1182, 0.0
      %v1254 = vmax.f32 %v1073, 0.0
      %v1255 = vmax.f32 %v1075, 0.0
      %v1256 = vmax.f32 %v1186, 0.0
      %v1257 = vmax.f32 %v1188, 0.0
      %v1258 = vmax.f32 %v1077, 0.0
      %v1259 = vmax.f32 %v1079, 0.0
      %v1260 = vmax.f32 %v1190, 0.0
      %v1261 = vmax.f32 %v1192, 0.0
      %v1262 = vmax.f32 %v1083, 0.0
      %v1263 = vmax.f32 %v1085, 0.0
      %v1264 = vmax.f32 %v1196, 0.0
      %v1265 = vmax.f32 %v1198, 0.0
      %v1266 = vmax.f32 %v1087, 0.0
      %v1267 = vmax.f32 %v1089, 0.0
      %v1268 = vmax.f32 %v1200, 0.0
      %v1269 = vmax.f32 %v1202, 0.0
      %v1270 = vmax.f32 %v1093, 0.0
      %v1271 = vmax.f32 %v1095, 0.0
      %v1272 = vmax.f32 %v1206, 0.0
      %v1273 = vmax.f32 %v1208, 0.0
      %v1274 = vmax.f32 %v1097, 0.0
      %v1275 = vmax.f32 %v1099, 0.0
      %v1276 = vmax.f32 %v1210, 0.0
      %v1277 = vmax.f32 %v1212, 0.0
      %v1278 = vmax.f32 %v1214, %v1215
      %v1279 = vmax.f32 %v1218, %v1219
      %v1280 = vmax.f32 %v1222, %v1223
      %v1281 = vmax.f32 %v1226, %v1227
      %v1282 = vmax.f32 %v1230, %v1231
      %v1283 = vmax.f32 %v1234, %v1235
      %v1284 = vmax.f32 %v1238, %v1239
      %v1285 = vmax.f32 %v1242, %v1243
      %v1286 = vmax.f32 %v1246, %v1247
      %v1287 = vmax.f32 %v1250, %v1251
      %v1288 = vmax.f32 %v1254, %v1255
      %v1289 = vmax.f32 %v1258, %v1259
      %v1290 = vmax.f32 %v1262, %v1263
      %v1291 = vmax.f32 %v1266, %v1267
      %v1292 = vmax.f32 %v1270, %v1271
      %v1293 = vmax.f32 %v1274, %v1275
      %v1294 = vmax.f32 %v1216, %v1217
      %v1295 = vmax.f32 %v1220, %v1221
      %v1296 = vmax.f32 %v1224, %v1225
      %v1297 = vmax.f32 %v1228, %v1229
      %v1298 = vmax.f32 %v1232, %v1233
      %v1299 = vmax.f32 %v1236, %v1237
      %v1300 = vmax.f32 %v1240, %v1241
      %v1301 = vmax.f32 %v1244, %v1245
      %v1302 = vmax.f32 %v1248, %v1249
      %v1303 = vmax.f32 %v1252, %v1253
      %v1304 = vmax.f32 %v1256, %v1257
      %v1305 = vmax.f32 %v1260, %v1261
      %v1306 = vmax.f32 %v1264, %v1265
      %v1307 = vmax.f32 %v1268, %v1269
      %v1308 = vmax.f32 %v1272, %v1273
      %v1309 = vmax.f32 %v1276, %v1277
      %v1310 = vmax.f32 %v1278, %v1294
      %v1311 = vmax.f32 %v1279, %v1295
      %v1312 = vmax.f32 %v1280, %v1296
      %v1313 = vmax.f32 %v1281, %v1297
      %v1314 = vmax.f32 %v1282, %v1298
      %v1315 = vmax.f32 %v1283, %v1299
      %v1316 = vmax.f32 %v1284, %v1300
      %v1317 = vmax.f32 %v1285, %v1301
      %v1318 = vmax.f32 %v1286, %v1302
      %v1319 = vmax.f32 %v1287, %v1303
      %v1320 = vmax.f32 %v1288, %v1304
      %v1321 = vmax.f32 %v1289, %v1305
      %v1322 = vmax.f32 %v1290, %v1306
      %v1323 = vmax.f32 %v1291, %v1307
      %v1324 = vmax.f32 %v1292, %v1308
      %v1325 = vmax.f32 %v1293, %v1309
      %v1326 = vpack.c.bf16 %v1311, %v1310
      %v1327 = vpack.c.bf16 %v1313, %v1312
      %v1328 = vpack.c.bf16 %v1315, %v1314
      %v1329 = vpack.c.bf16 %v1317, %v1316
      %v1330 = vpack.c.bf16 %v1319, %v1318
      %v1331 = vpack.c.bf16 %v1321, %v1320
      %v1332 = vpack.c.bf16 %v1323, %v1322
      %v1333 = vpack.c.bf16 %v1325, %v1324
      %v1334 = vld [vmem:[%s3 + $0x10] sm:$0xf]
      %v1335 = vld [vmem:[%s3 + $0x2c] sm:$0xf]
      %v1336 = vld [vmem:[%s3 + $0x48] sm:$0xf]
      %v1337 = vld [vmem:[%s3 + $0x64] sm:$0xf]
      %v1338 = vld [vmem:[%s3 + $0x80] sm:$0xf]
      %v1339 = vld [vmem:[%s3 + $0x9c] sm:$0xf]
      %v1340 = vld [vmem:[%s3 + $0xb8] sm:$0xf]
      %v1341 = vld [vmem:[%s3 + $0xd4] sm:$0xf]
      %v1342 = vld [vmem:[%s3 + $0xf0] sm:$0xf]
      %v1343 = vld [vmem:[%s3 + $0x10c] sm:$0xf]
      %v1344 = vld [vmem:[%s3 + $0x128] sm:$0xf]
      %v1345 = vld [vmem:[%s3 + $0x144] sm:$0xf]
      %v1346 = vld [vmem:[%s3 + $0x160] sm:$0xf]
      %v1347 = vld [vmem:[%s3 + $0x17c] sm:$0xf]
      %v1348 = vld [vmem:[%s3 + $0x198] sm:$0xf]
      %v1349 = vld [vmem:[%s3 + $0x1b4] sm:$0xf]
      %v1366 = vunpack.c.l.b16 %v1334
      %v1367 = vunpack.c.l.b16 %v1335
      %v1368 = vunpack.c.l.b16 %v1336
      %v1369 = vunpack.c.l.b16 %v1337
      %v1370 = vunpack.c.l.b16 %v1338
      %v1371 = vunpack.c.l.b16 %v1339
      %v1372 = vunpack.c.l.b16 %v1340
      %v1373 = vunpack.c.l.b16 %v1341
      %v1374 = vunpack.c.l.b16 %v1342
      %v1375 = vunpack.c.l.b16 %v1343
      %v1376 = vunpack.c.l.b16 %v1344
      %v1377 = vunpack.c.l.b16 %v1345
      %v1378 = vunpack.c.l.b16 %v1346
      %v1379 = vunpack.c.l.b16 %v1347
      %v1380 = vunpack.c.l.b16 %v1348
      %v1381 = vunpack.c.l.b16 %v1349
      %v1382 = vpack.c.b16 %v1367, %v1366
      %v1383 = vpack.c.b16 %v1369, %v1368
      %v1384 = vpack.c.b16 %v1371, %v1370
      %v1385 = vpack.c.b16 %v1373, %v1372
      %v1386 = vpack.c.b16 %v1375, %v1374
      %v1387 = vpack.c.b16 %v1377, %v1376
      %v1388 = vpack.c.b16 %v1379, %v1378
      %v1389 = vpack.c.b16 %v1381, %v1380
      %1398 = vmatprep.subr.bf16.mxu0 0
      %1399 = vmatpush1.bf16.msra.mxu0 %v1382
      %1400 = vmatprep.subr.bf16.mxu0 0
      %1401 = vmatpush1.bf16.msra.mxu0 %v1383
      %1402 = vmatprep.subr.bf16.mxu0 0
      %1403 = vmatpush1.bf16.msra.mxu0 %v1384
      %1404 = vmatprep.subr.bf16.mxu0 0
      %1405 = vmatpush1.bf16.msra.mxu0 %v1385
      %1406 = vmatprep.subr.bf16.mxu0 0
      %1407 = vmatpush1.bf16.msra.mxu0 %v1386
      %1408 = vmatprep.subr.bf16.mxu0 0
      %1409 = vmatpush1.bf16.msra.mxu0 %v1387
      %1410 = vmatprep.subr.bf16.mxu0 0
      %1411 = vmatpush1.bf16.msra.mxu0 %v1388
      %1412 = vmatprep.subr.bf16.mxu0 0
      %1413 = vmatpush1.bf16.msra.mxu0 %v1389
      %1414 = vmatprep.subr.bf16.mxu0 0
      %1415 = vmatpush1.bf16.msra.mxu0 0
      %1416 = vmatprep.subr.bf16.mxu0 0
      %1417 = vmatpush1.bf16.msra.mxu0 0
      %1418 = vmatprep.subr.bf16.mxu0 0
      %1419 = vmatpush1.bf16.msra.mxu0 0
      %1420 = vmatprep.subr.bf16.mxu0 0
      %1421 = vmatpush1.bf16.msra.mxu0 0
      %1422 = vmatprep.subr.bf16.mxu0 0
      %1423 = vmatpush1.bf16.msra.mxu0 0
      %1424 = vmatprep.subr.bf16.mxu0 0
      %1425 = vmatpush1.bf16.msra.mxu0 0
      %1426 = vmatprep.subr.bf16.mxu0 0
      %1427 = vmatpush1.bf16.msra.mxu0 0
      %1428 = vmatprep.subr.bf16.mxu0 0
      %1429 = vmatpush1.bf16.msra.mxu0 0
      %1430 = vmatprep.mubr.bf16.mxu0 0
      %1431 = vmatmul.mubr.bf16.gmra.mrb[0].mxu0 %v1326
      %v1432 = vpop.f32.mrb[0].mxu0
      %v1433 = vadd.f32 %v252, %v1432
      %v1434 = vpop.f32.mrb[0].mxu0
      %v1435 = vpop.f32.mrb[0].mxu0
      %v1436 = vadd.f32 %v252, %v1435
      %v1437 = vpop.f32.mrb[0].mxu0
      %1438 = vmatprep.mubr.bf16.mxu0 0
      %1439 = vmatmul.mubr.bf16.gmra.mrb[0].mxu0 %v1327
      %v1440 = vpop.f32.mrb[0].mxu0
      %v1441 = vadd.f32 %v252, %v1440
      %v1442 = vpop.f32.mrb[0].mxu0
      %v1443 = vpop.f32.mrb[0].mxu0
      %v1444 = vadd.f32 %v252, %v1443
      %v1445 = vpop.f32.mrb[0].mxu0
      %1446 = vmatprep.mubr.bf16.mxu0 0
      %1447 = vmatmul.mubr.bf16.gmra.mrb[0].mxu0 %v1328
      %v1448 = vpop.f32.mrb[0].mxu0
      %v1449 = vadd.f32 %v252, %v1448
      %v1450 = vpop.f32.mrb[0].mxu0
      %v1451 = vpop.f32.mrb[0].mxu0
      %v1452 = vadd.f32 %v252, %v1451
      %v1453 = vpop.f32.mrb[0].mxu0
      %1454 = vmatprep.mubr.bf16.mxu0 0
      %1455 = vmatmul.mubr.bf16.gmra.mrb[0].mxu0 %v1329
      %v1456 = vpop.f32.mrb[0].mxu0
      %v1457 = vadd.f32 %v252, %v1456
      %v1458 = vpop.f32.mrb[0].mxu0
      %v1459 = vpop.f32.mrb[0].mxu0
      %v1460 = vadd.f32 %v252, %v1459
      %v1461 = vpop.f32.mrb[0].mxu0
      %1462 = vmatprep.mubr.bf16.mxu0 0
      %1463 = vmatmul.mubr.bf16.gmra.mrb[0].mxu0 %v1330
      %v1464 = vpop.f32.mrb[0].mxu0
      %v1465 = vadd.f32 %v252, %v1464
      %v1466 = vpop.f32.mrb[0].mxu0
      %v1467 = vpop.f32.mrb[0].mxu0
      %v1468 = vadd.f32 %v252, %v1467
      %v1469 = vpop.f32.mrb[0].mxu0
      %1470 = vmatprep.mubr.bf16.mxu0 0
      %1471 = vmatmul.mubr.bf16.gmra.mrb[0].mxu0 %v1331
      %v1472 = vpop.f32.mrb[0].mxu0
      %v1473 = vadd.f32 %v252, %v1472
      %v1474 = vpop.f32.mrb[0].mxu0
      %v1475 = vpop.f32.mrb[0].mxu0
      %v1476 = vadd.f32 %v252, %v1475
      %v1477 = vpop.f32.mrb[0].mxu0
      %1478 = vmatprep.mubr.bf16.mxu0 0
      %1479 = vmatmul.mubr.bf16.gmra.mrb[0].mxu0 %v1332
      %v1480 = vpop.f32.mrb[0].mxu0
      %v1481 = vadd.f32 %v252, %v1480
      %v1482 = vpop.f32.mrb[0].mxu0
      %v1483 = vpop.f32.mrb[0].mxu0
      %v1484 = vadd.f32 %v252, %v1483
      %v1485 = vpop.f32.mrb[0].mxu0
      %1486 = vmatprep.mubr.bf16.mxu0 0
      %1487 = vmatmul.mubr.bf16.gmra.mrb[0].mxu0 %v1333
      %v1488 = vpop.f32.mrb[0].mxu0
      %v1489 = vadd.f32 %v252, %v1488
      %v1490 = vpop.f32.mrb[0].mxu0
      %v1491 = vpop.f32.mrb[0].mxu0
      %v1492 = vadd.f32 %v252, %v1491
      %v1493 = vpop.f32.mrb[0].mxu0
      %1494 = vdwg.mxu0
      %v1495 = vmax.f32 %v1433, 0.0
      %v1496 = vmax.f32 %v1436, 0.0
      %v1497 = vmax.f32 %v1441, 0.0
      %v1498 = vmax.f32 %v1444, 0.0
      %v1499 = vmax.f32 %v1449, 0.0
      %v1500 = vmax.f32 %v1452, 0.0
      %v1501 = vmax.f32 %v1457, 0.0
      %v1502 = vmax.f32 %v1460, 0.0
      %v1503 = vmax.f32 %v1465, 0.0
      %v1504 = vmax.f32 %v1468, 0.0
      %v1505 = vmax.f32 %v1473, 0.0
      %v1506 = vmax.f32 %v1476, 0.0
      %v1507 = vmax.f32 %v1481, 0.0
      %v1508 = vmax.f32 %v1484, 0.0
      %v1509 = vmax.f32 %v1489, 0.0
      %v1510 = vmax.f32 %v1492, 0.0
      %v1511 = vpack.c.bf16 %v1496, %v1495
      %v1512 = vpack.c.bf16 %v1498, %v1497
      %v1513 = vpack.c.bf16 %v1500, %v1499
      %v1514 = vpack.c.bf16 %v1502, %v1501
      %v1515 = vpack.c.bf16 %v1504, %v1503
      %v1516 = vpack.c.bf16 %v1506, %v1505
      %v1517 = vpack.c.bf16 %v1508, %v1507
      %v1518 = vpack.c.bf16 %v1510, %v1509
      %v1519 = vld [vmem:[%s3 + $0x14] sm:$0xf]
      %v1520 = vld [vmem:[%s3 + $0x30] sm:$0xf]
      %v1521 = vld [vmem:[%s3 + $0x4c] sm:$0xf]
      %v1522 = vld [vmem:[%s3 + $0x68] sm:$0xf]
      %v1523 = vld [vmem:[%s3 + $0x84] sm:$0xf]
      %v1524 = vld [vmem:[%s3 + $0xa0] sm:$0xf]
      %v1525 = vld [vmem:[%s3 + $0xbc] sm:$0xf]
      %v1526 = vld [vmem:[%s3 + $0xd8] sm:$0xf]
      %v1527 = vld [vmem:[%s3 + $0xf4] sm:$0xf]
      %v1528 = vld [vmem:[%s3 + $0x110] sm:$0xf]
      %v1529 = vld [vmem:[%s3 + $0x12c] sm:$0xf]
      %v1530 = vld [vmem:[%s3 + $0x148] sm:$0xf]
      %v1531 = vld [vmem:[%s3 + $0x164] sm:$0xf]
      %v1532 = vld [vmem:[%s3 + $0x180] sm:$0xf]
      %v1533 = vld [vmem:[%s3 + $0x19c] sm:$0xf]
      %v1534 = vld [vmem:[%s3 + $0x1b8] sm:$0xf]
      %v1551 = vunpack.c.l.b16 %v1519
      %v1552 = vunpack.c.l.b16 %v1520
      %v1553 = vunpack.c.l.b16 %v1521
      %v1554 = vunpack.c.l.b16 %v1522
      %v1555 = vunpack.c.l.b16 %v1523
      %v1556 = vunpack.c.l.b16 %v1524
      %v1557 = vunpack.c.l.b16 %v1525
      %v1558 = vunpack.c.l.b16 %v1526
      %v1559 = vunpack.c.l.b16 %v1527
      %v1560 = vunpack.c.l.b16 %v1528
      %v1561 = vunpack.c.l.b16 %v1529
      %v1562 = vunpack.c.l.b16 %v1530
      %v1563 = vunpack.c.l.b16 %v1531
      %v1564 = vunpack.c.l.b16 %v1532
      %v1565 = vunpack.c.l.b16 %v1533
      %v1566 = vunpack.c.l.b16 %v1534
      %v1567 = vpack.c.b16 %v1552, %v1551
      %v1568 = vpack.c.b16 %v1554, %v1553
      %v1569 = vpack.c.b16 %v1556, %v1555
      %v1570 = vpack.c.b16 %v1558, %v1557
      %v1571 = vpack.c.b16 %v1560, %v1559
      %v1572 = vpack.c.b16 %v1562, %v1561
      %v1573 = vpack.c.b16 %v1564, %v1563
      %v1574 = vpack.c.b16 %v1566, %v1565
      %1583 = vmatprep.subr.bf16.mxu0 0
      %1584 = vmatpush1.bf16.msra.mxu0 %v1567
      %1585 = vmatprep.subr.bf16.mxu0 0
      %1586 = vmatpush1.bf16.msra.mxu0 %v1568
      %1587 = vmatprep.subr.bf16.mxu0 0
      %1588 = vmatpush1.bf16.msra.mxu0 %v1569
      %1589 = vmatprep.subr.bf16.mxu0 0
      %1590 = vmatpush1.bf16.msra.mxu0 %v1570
      %1591 = vmatprep.subr.bf16.mxu0 0
      %1592 = vmatpush1.bf16.msra.mxu0 %v1571
      %1593 = vmatprep.subr.bf16.mxu0 0
      %1594 = vmatpush1.bf16.msra.mxu0 %v1572
      %1595 = vmatprep.subr.bf16.mxu0 0
      %1596 = vmatpush1.bf16.msra.mxu0 %v1573
      %1597 = vmatprep.subr.bf16.mxu0 0
      %1598 = vmatpush1.bf16.msra.mxu0 %v1574
      %1599 = vmatprep.subr.bf16.mxu0 0
      %1600 = vmatpush1.bf16.msra.mxu0 0
      %1601 = vmatprep.subr.bf16.mxu0 0
      %1602 = vmatpush1.bf16.msra.mxu0 0
      %1603 = vmatprep.subr.bf16.mxu0 0
      %1604 = vmatpush1.bf16.msra.mxu0 0
      %1605 = vmatprep.subr.bf16.mxu0 0
      %1606 = vmatpush1.bf16.msra.mxu0 0
      %1607 = vmatprep.subr.bf16.mxu0 0
      %1608 = vmatpush1.bf16.msra.mxu0 0
      %1609 = vmatprep.subr.bf16.mxu0 0
      %1610 = vmatpush1.bf16.msra.mxu0 0
      %1611 = vmatprep.subr.bf16.mxu0 0
      %1612 = vmatpush1.bf16.msra.mxu0 0
      %1613 = vmatprep.subr.bf16.mxu0 0
      %1614 = vmatpush1.bf16.msra.mxu0 0
      %1615 = vmatprep.mubr.bf16.mxu0 0
      %1616 = vmatmul.mubr.bf16.gmra.mrb[0].mxu0 %v1511
      %v1617 = vpop.f32.mrb[0].mxu0
      %v1618 = vadd.f32 0.0, %v1617
      %v1619 = vpop.f32.mrb[0].mxu0
      %v1620 = vpop.f32.mrb[0].mxu0
      %v1621 = vadd.f32 0.0, %v1620
      %v1622 = vpop.f32.mrb[0].mxu0
      %1623 = vmatprep.mubr.bf16.mxu0 0
      %1624 = vmatmul.mubr.bf16.gmra.mrb[0].mxu0 %v1512
      %v1625 = vpop.f32.mrb[0].mxu0
      %v1626 = vadd.f32 0.0, %v1625
      %v1627 = vpop.f32.mrb[0].mxu0
      %v1628 = vpop.f32.mrb[0].mxu0
      %v1629 = vadd.f32 0.0, %v1628
      %v1630 = vpop.f32.mrb[0].mxu0
      %1631 = vmatprep.mubr.bf16.mxu0 0
      %1632 = vmatmul.mubr.bf16.gmra.mrb[0].mxu0 %v1513
      %v1633 = vpop.f32.mrb[0].mxu0
      %v1634 = vadd.f32 0.0, %v1633
      %v1635 = vpop.f32.mrb[0].mxu0
      %v1636 = vpop.f32.mrb[0].mxu0
      %v1637 = vadd.f32 0.0, %v1636
      %v1638 = vpop.f32.mrb[0].mxu0
      %1639 = vmatprep.mubr.bf16.mxu0 0
      %1640 = vmatmul.mubr.bf16.gmra.mrb[0].mxu0 %v1514
      %v1641 = vpop.f32.mrb[0].mxu0
      %v1642 = vadd.f32 0.0, %v1641
      %v1643 = vpop.f32.mrb[0].mxu0
      %v1644 = vpop.f32.mrb[0].mxu0
      %v1645 = vadd.f32 0.0, %v1644
      %v1646 = vpop.f32.mrb[0].mxu0
      %1647 = vmatprep.mubr.bf16.mxu0 0
      %1648 = vmatmul.mubr.bf16.gmra.mrb[0].mxu0 %v1515
      %v1649 = vpop.f32.mrb[0].mxu0
      %v1650 = vadd.f32 0.0, %v1649
      %v1651 = vpop.f32.mrb[0].mxu0
      %v1652 = vpop.f32.mrb[0].mxu0
      %v1653 = vadd.f32 0.0, %v1652
      %v1654 = vpop.f32.mrb[0].mxu0
      %1655 = vmatprep.mubr.bf16.mxu0 0
      %1656 = vmatmul.mubr.bf16.gmra.mrb[0].mxu0 %v1516
      %v1657 = vpop.f32.mrb[0].mxu0
      %v1658 = vadd.f32 0.0, %v1657
      %v1659 = vpop.f32.mrb[0].mxu0
      %v1660 = vpop.f32.mrb[0].mxu0
      %v1661 = vadd.f32 0.0, %v1660
      %v1662 = vpop.f32.mrb[0].mxu0
      %1663 = vmatprep.mubr.bf16.mxu0 0
      %1664 = vmatmul.mubr.bf16.gmra.mrb[0].mxu0 %v1517
      %v1665 = vpop.f32.mrb[0].mxu0
      %v1666 = vadd.f32 0.0, %v1665
      %v1667 = vpop.f32.mrb[0].mxu0
      %v1668 = vpop.f32.mrb[0].mxu0
      %v1669 = vadd.f32 0.0, %v1668
      %v1670 = vpop.f32.mrb[0].mxu0
      %1671 = vmatprep.mubr.bf16.mxu0 0
      %1672 = vmatmul.mubr.bf16.gmra.mrb[0].mxu0 %v1518
      %v1673 = vpop.f32.mrb[0].mxu0
      %v1674 = vadd.f32 0.0, %v1673
      %v1675 = vpop.f32.mrb[0].mxu0
      %v1676 = vpop.f32.mrb[0].mxu0
      %v1677 = vadd.f32 0.0, %v1676
      %v1678 = vpop.f32.mrb[0].mxu0
      %1679 = vdwg.mxu0
      %v1680 = vld [vmem:[%s241] sm:$0xf]
      %v1681 = vld [vmem:[%s241 + $0x4] sm:$0xf]
      %v1682 = vld [vmem:[%s241 + $0x8] sm:$0xf]
      %v1683 = vld [vmem:[%s241 + $0xc] sm:$0xf]
      %v1684 = vld [vmem:[%s241 + $0x10] sm:$0xf]
      %v1685 = vld [vmem:[%s241 + $0x14] sm:$0xf]
      %v1686 = vld [vmem:[%s241 + $0x18] sm:$0xf]
      %v1687 = vld [vmem:[%s241 + $0x1c] sm:$0xf]
      %v1688 = vld [vmem:[%s241 + $0x20] sm:$0xf]
      %v1689 = vld [vmem:[%s241 + $0x24] sm:$0xf]
      %v1690 = vld [vmem:[%s241 + $0x28] sm:$0xf]
      %v1691 = vld [vmem:[%s241 + $0x2c] sm:$0xf]
      %v1692 = vld [vmem:[%s241 + $0x30] sm:$0xf]
      %v1693 = vld [vmem:[%s241 + $0x34] sm:$0xf]
      %v1694 = vld [vmem:[%s241 + $0x38] sm:$0xf]
      %v1695 = vld [vmem:[%s241 + $0x3c] sm:$0xf]
      %v1696 = vpack.c.bf16 %v1621, %v1618
      %v1697 = vpack.c.bf16 %v1629, %v1626
      %v1698 = vpack.c.bf16 %v1637, %v1634
      %v1699 = vpack.c.bf16 %v1645, %v1642
      %v1700 = vpack.c.bf16 %v1653, %v1650
      %v1701 = vpack.c.bf16 %v1661, %v1658
      %v1702 = vpack.c.bf16 %v1669, %v1666
      %v1703 = vpack.c.bf16 %v1677, %v1674
      %v1720 = vunpack.c.l.b16 %v1680
      %v1721 = vunpack.c.l.b16 %v1681
      %v1722 = vunpack.c.l.b16 %v1682
      %v1723 = vunpack.c.l.b16 %v1683
      %v1724 = vunpack.c.l.b16 %v1684
      %v1725 = vunpack.c.l.b16 %v1685
      %v1726 = vunpack.c.l.b16 %v1686
      %v1727 = vunpack.c.l.b16 %v1687
      %v1728 = vunpack.c.l.b16 %v1688
      %v1729 = vunpack.c.l.b16 %v1689
      %v1730 = vunpack.c.l.b16 %v1690
      %v1731 = vunpack.c.l.b16 %v1691
      %v1732 = vunpack.c.l.b16 %v1692
      %v1733 = vunpack.c.l.b16 %v1693
      %v1734 = vunpack.c.l.b16 %v1694
      %v1735 = vunpack.c.l.b16 %v1695
      %v1736 = vpack.c.b16 %v1721, %v1720
      %v1737 = vpack.c.b16 %v1723, %v1722
      %v1738 = vpack.c.b16 %v1725, %v1724
      %v1739 = vpack.c.b16 %v1727, %v1726
      %v1740 = vpack.c.b16 %v1729, %v1728
      %v1741 = vpack.c.b16 %v1731, %v1730
      %v1742 = vpack.c.b16 %v1733, %v1732
      %v1743 = vpack.c.b16 %v1735, %v1734
      %1752 = vmatprep.subr.bf16.mxu0 0
      %1753 = vmatpush1.bf16.msra.mxu0 %v1696
      %1754 = vmatprep.subr.bf16.mxu0 0
      %1755 = vmatpush1.bf16.msra.mxu0 %v1697
      %1756 = vmatprep.subr.bf16.mxu0 0
      %1757 = vmatpush1.bf16.msra.mxu0 %v1698
      %1758 = vmatprep.subr.bf16.mxu0 0
      %1759 = vmatpush1.bf16.msra.mxu0 %v1699
      %1760 = vmatprep.subr.bf16.mxu0 0
      %1761 = vmatpush1.bf16.msra.mxu0 %v1700
      %1762 = vmatprep.subr.bf16.mxu0 0
      %1763 = vmatpush1.bf16.msra.mxu0 %v1701
      %1764 = vmatprep.subr.bf16.mxu0 0
      %1765 = vmatpush1.bf16.msra.mxu0 %v1702
      %1766 = vmatprep.subr.bf16.mxu0 0
      %1767 = vmatpush1.bf16.msra.mxu0 %v1703
      %1768 = vmatprep.subr.bf16.mxu0 0
      %1769 = vmatpush1.bf16.msra.mxu0 0
      %1770 = vmatprep.subr.bf16.mxu0 0
      %1771 = vmatpush1.bf16.msra.mxu0 0
      %1772 = vmatprep.subr.bf16.mxu0 0
      %1773 = vmatpush1.bf16.msra.mxu0 0
      %1774 = vmatprep.subr.bf16.mxu0 0
      %1775 = vmatpush1.bf16.msra.mxu0 0
      %1776 = vmatprep.subr.bf16.mxu0 0
      %1777 = vmatpush1.bf16.msra.mxu0 0
      %1778 = vmatprep.subr.bf16.mxu0 0
      %1779 = vmatpush1.bf16.msra.mxu0 0
      %1780 = vmatprep.subr.bf16.mxu0 0
      %1781 = vmatpush1.bf16.msra.mxu0 0
      %1782 = vmatprep.subr.bf16.mxu0 0
      %1783 = vmatpush1.bf16.msra.mxu0 0
      %1784 = vmatprep.mubr.bf16.mxu0 0
      %1785 = vmatmul.mubr.bf16.gmra.mrb[0].mxu0 %v1736
      %v1786 = vpop.f32.mrb[0].mxu0
      %v1787 = vadd.f32 %v253, %v1786
      %v1788 = vpop.f32.mrb[0].mxu0
      %v1789 = vpop.f32.mrb[0].mxu0
      %v1790 = vadd.f32 %v253, %v1789
      %v1791 = vpop.f32.mrb[0].mxu0
      %1792 = vmatprep.mubr.bf16.mxu0 0
      %1793 = vmatmul.mubr.bf16.gmra.mrb[0].mxu0 %v1737
      %v1794 = vpop.f32.mrb[0].mxu0
      %v1795 = vadd.f32 %v253, %v1794
      %v1796 = vpop.f32.mrb[0].mxu0
      %v1797 = vpop.f32.mrb[0].mxu0
      %v1798 = vadd.f32 %v253, %v1797
      %v1799 = vpop.f32.mrb[0].mxu0
      %1800 = vmatprep.mubr.bf16.mxu0 0
      %1801 = vmatmul.mubr.bf16.gmra.mrb[0].mxu0 %v1738
      %v1802 = vpop.f32.mrb[0].mxu0
      %v1803 = vadd.f32 %v253, %v1802
      %v1804 = vpop.f32.mrb[0].mxu0
      %v1805 = vpop.f32.mrb[0].mxu0
      %v1806 = vadd.f32 %v253, %v1805
      %v1807 = vpop.f32.mrb[0].mxu0
      %1808 = vmatprep.mubr.bf16.mxu0 0
      %1809 = vmatmul.mubr.bf16.gmra.mrb[0].mxu0 %v1739
      %v1810 = vpop.f32.mrb[0].mxu0
      %v1811 = vadd.f32 %v253, %v1810
      %v1812 = vpop.f32.mrb[0].mxu0
      %v1813 = vpop.f32.mrb[0].mxu0
      %v1814 = vadd.f32 %v253, %v1813
      %v1815 = vpop.f32.mrb[0].mxu0
      %1816 = vmatprep.mubr.bf16.mxu0 0
      %1817 = vmatmul.mubr.bf16.gmra.mrb[0].mxu0 %v1740
      %v1818 = vpop.f32.mrb[0].mxu0
      %v1819 = vadd.f32 %v253, %v1818
      %v1820 = vpop.f32.mrb[0].mxu0
      %v1821 = vpop.f32.mrb[0].mxu0
      %v1822 = vadd.f32 %v253, %v1821
      %v1823 = vpop.f32.mrb[0].mxu0
      %1824 = vmatprep.mubr.bf16.mxu0 0
      %1825 = vmatmul.mubr.bf16.gmra.mrb[0].mxu0 %v1741
      %v1826 = vpop.f32.mrb[0].mxu0
      %v1827 = vadd.f32 %v253, %v1826
      %v1828 = vpop.f32.mrb[0].mxu0
      %v1829 = vpop.f32.mrb[0].mxu0
      %v1830 = vadd.f32 %v253, %v1829
      %v1831 = vpop.f32.mrb[0].mxu0
      %1832 = vmatprep.mubr.bf16.mxu0 0
      %1833 = vmatmul.mubr.bf16.gmra.mrb[0].mxu0 %v1742
      %v1834 = vpop.f32.mrb[0].mxu0
      %v1835 = vadd.f32 %v253, %v1834
      %v1836 = vpop.f32.mrb[0].mxu0
      %v1837 = vpop.f32.mrb[0].mxu0
      %v1838 = vadd.f32 %v253, %v1837
      %v1839 = vpop.f32.mrb[0].mxu0
      %1840 = vmatprep.mubr.bf16.mxu0 0
      %1841 = vmatmul.mubr.bf16.gmra.mrb[0].mxu0 %v1743
      %v1842 = vpop.f32.mrb[0].mxu0
      %v1843 = vadd.f32 %v253, %v1842
      %v1844 = vpop.f32.mrb[0].mxu0
      %v1845 = vpop.f32.mrb[0].mxu0
      %v1846 = vadd.f32 %v253, %v1845
      %v1847 = vpop.f32.mrb[0].mxu0
      %1848 = vdwg.mxu0
      %v1849 = vmax.f32 %v1787, 0.0
      %v1850 = vmax.f32 %v1790, 0.0
      %v1851 = vmax.f32 %v1795, 0.0
      %v1852 = vmax.f32 %v1798, 0.0
      %v1853 = vmax.f32 %v1803, 0.0
      %v1854 = vmax.f32 %v1806, 0.0
      %v1855 = vmax.f32 %v1811, 0.0
      %v1856 = vmax.f32 %v1814, 0.0
      %v1857 = vmax.f32 %v1819, 0.0
      %v1858 = vmax.f32 %v1822, 0.0
      %v1859 = vmax.f32 %v1827, 0.0
      %v1860 = vmax.f32 %v1830, 0.0
      %v1861 = vmax.f32 %v1835, 0.0
      %v1862 = vmax.f32 %v1838, 0.0
      %v1863 = vmax.f32 %v1843, 0.0
      %v1864 = vmax.f32 %v1846, 0.0
      %v1865 = vpack.c.bf16 %v1850, %v1849
      %v1866 = vpack.c.bf16 %v1852, %v1851
      %v1867 = vpack.c.bf16 %v1854, %v1853
      %v1868 = vpack.c.bf16 %v1856, %v1855
      %v1869 = vpack.c.bf16 %v1858, %v1857
      %v1870 = vpack.c.bf16 %v1860, %v1859
      %v1871 = vpack.c.bf16 %v1862, %v1861
      %v1872 = vpack.c.bf16 %v1864, %v1863
      %v1873 = vld [vmem:[%s3 + $0x18] sm:$0xf]
      %v1874 = vld [vmem:[%s3 + $0x34] sm:$0xf]
      %v1875 = vld [vmem:[%s3 + $0x50] sm:$0xf]
      %v1876 = vld [vmem:[%s3 + $0x6c] sm:$0xf]
      %v1877 = vld [vmem:[%s3 + $0x88] sm:$0xf]
      %v1878 = vld [vmem:[%s3 + $0xa4] sm:$0xf]
      %v1879 = vld [vmem:[%s3 + $0xc0] sm:$0xf]
      %v1880 = vld [vmem:[%s3 + $0xdc] sm:$0xf]
      %v1881 = vld [vmem:[%s3 + $0xf8] sm:$0xf]
      %v1882 = vld [vmem:[%s3 + $0x114] sm:$0xf]
      %v1883 = vld [vmem:[%s3 + $0x130] sm:$0xf]
      %v1884 = vld [vmem:[%s3 + $0x14c] sm:$0xf]
      %v1885 = vld [vmem:[%s3 + $0x168] sm:$0xf]
      %v1886 = vld [vmem:[%s3 + $0x184] sm:$0xf]
      %v1887 = vld [vmem:[%s3 + $0x1a0] sm:$0xf]
      %v1888 = vld [vmem:[%s3 + $0x1bc] sm:$0xf]
      %v1905 = vunpack.c.l.b16 %v1873
      %v1906 = vunpack.c.l.b16 %v1874
      %v1907 = vunpack.c.l.b16 %v1875
      %v1908 = vunpack.c.l.b16 %v1876
      %v1909 = vunpack.c.l.b16 %v1877
      %v1910 = vunpack.c.l.b16 %v1878
      %v1911 = vunpack.c.l.b16 %v1879
      %v1912 = vunpack.c.l.b16 %v1880
      %v1913 = vunpack.c.l.b16 %v1881
      %v1914 = vunpack.c.l.b16 %v1882
      %v1915 = vunpack.c.l.b16 %v1883
      %v1916 = vunpack.c.l.b16 %v1884
      %v1917 = vunpack.c.l.b16 %v1885
      %v1918 = vunpack.c.l.b16 %v1886
      %v1919 = vunpack.c.l.b16 %v1887
      %v1920 = vunpack.c.l.b16 %v1888
      %v1921 = vpack.c.b16 %v1906, %v1905
      %v1922 = vpack.c.b16 %v1908, %v1907
      %v1923 = vpack.c.b16 %v1910, %v1909
      %v1924 = vpack.c.b16 %v1912, %v1911
      %v1925 = vpack.c.b16 %v1914, %v1913
      %v1926 = vpack.c.b16 %v1916, %v1915
      %v1927 = vpack.c.b16 %v1918, %v1917
      %v1928 = vpack.c.b16 %v1920, %v1919
      %1937 = vmatprep.subr.bf16.mxu0 0
      %1938 = vmatpush1.bf16.msra.mxu0 %v1921
      %1939 = vmatprep.subr.bf16.mxu0 0
      %1940 = vmatpush1.bf16.msra.mxu0 %v1922
      %1941 = vmatprep.subr.bf16.mxu0 0
      %1942 = vmatpush1.bf16.msra.mxu0 %v1923
      %1943 = vmatprep.subr.bf16.mxu0 0
      %1944 = vmatpush1.bf16.msra.mxu0 %v1924
      %1945 = vmatprep.subr.bf16.mxu0 0
      %1946 = vmatpush1.bf16.msra.mxu0 %v1925
      %1947 = vmatprep.subr.bf16.mxu0 0
      %1948 = vmatpush1.bf16.msra.mxu0 %v1926
      %1949 = vmatprep.subr.bf16.mxu0 0
      %1950 = vmatpush1.bf16.msra.mxu0 %v1927
      %1951 = vmatprep.subr.bf16.mxu0 0
      %1952 = vmatpush1.bf16.msra.mxu0 %v1928
      %1953 = vmatprep.subr.bf16.mxu0 0
      %1954 = vmatpush1.bf16.msra.mxu0 0
      %1955 = vmatprep.subr.bf16.mxu0 0
      %1956 = vmatpush1.bf16.msra.mxu0 0
      %1957 = vmatprep.subr.bf16.mxu0 0
      %1958 = vmatpush1.bf16.msra.mxu0 0
      %1959 = vmatprep.subr.bf16.mxu0 0
      %1960 = vmatpush1.bf16.msra.mxu0 0
      %1961 = vmatprep.subr.bf16.mxu0 0
      %1962 = vmatpush1.bf16.msra.mxu0 0
      %1963 = vmatprep.subr.bf16.mxu0 0
      %1964 = vmatpush1.bf16.msra.mxu0 0
      %1965 = vmatprep.subr.bf16.mxu0 0
      %1966 = vmatpush1.bf16.msra.mxu0 0
      %1967 = vmatprep.subr.bf16.mxu0 0
      %1968 = vmatpush1.bf16.msra.mxu0 0
      %1969 = vmatprep.mubr.bf16.mxu0 0
      %1970 = vmatmul.mubr.bf16.gmra.mrb[0].mxu0 %v1865
      %v1971 = vpop.f32.mrb[0].mxu0
      %v1972 = vadd.f32 %v254, %v1971
      %v1973 = vpop.f32.mrb[0].mxu0
      %v1974 = vpop.f32.mrb[0].mxu0
      %v1975 = vadd.f32 %v254, %v1974
      %v1976 = vpop.f32.mrb[0].mxu0
      %1977 = vmatprep.mubr.bf16.mxu0 0
      %1978 = vmatmul.mubr.bf16.gmra.mrb[0].mxu0 %v1866
      %v1979 = vpop.f32.mrb[0].mxu0
      %v1980 = vadd.f32 %v254, %v1979
      %v1981 = vpop.f32.mrb[0].mxu0
      %v1982 = vpop.f32.mrb[0].mxu0
      %v1983 = vadd.f32 %v254, %v1982
      %v1984 = vpop.f32.mrb[0].mxu0
      %1985 = vmatprep.mubr.bf16.mxu0 0
      %1986 = vmatmul.mubr.bf16.gmra.mrb[0].mxu0 %v1867
      %v1987 = vpop.f32.mrb[0].mxu0
      %v1988 = vadd.f32 %v254, %v1987
      %v1989 = vpop.f32.mrb[0].mxu0
      %v1990 = vpop.f32.mrb[0].mxu0
      %v1991 = vadd.f32 %v254, %v1990
      %v1992 = vpop.f32.mrb[0].mxu0
      %1993 = vmatprep.mubr.bf16.mxu0 0
      %1994 = vmatmul.mubr.bf16.gmra.mrb[0].mxu0 %v1868
      %v1995 = vpop.f32.mrb[0].mxu0
      %v1996 = vadd.f32 %v254, %v1995
      %v1997 = vpop.f32.mrb[0].mxu0
      %v1998 = vpop.f32.mrb[0].mxu0
      %v1999 = vadd.f32 %v254, %v1998
      %v2000 = vpop.f32.mrb[0].mxu0
      %2001 = vmatprep.mubr.bf16.mxu0 0
      %2002 = vmatmul.mubr.bf16.gmra.mrb[0].mxu0 %v1869
      %v2003 = vpop.f32.mrb[0].mxu0
      %v2004 = vadd.f32 %v254, %v2003
      %v2005 = vpop.f32.mrb[0].mxu0
      %v2006 = vpop.f32.mrb[0].mxu0
      %v2007 = vadd.f32 %v254, %v2006
      %v2008 = vpop.f32.mrb[0].mxu0
      %2009 = vmatprep.mubr.bf16.mxu0 0
      %2010 = vmatmul.mubr.bf16.gmra.mrb[0].mxu0 %v1870
      %v2011 = vpop.f32.mrb[0].mxu0
      %v2012 = vadd.f32 %v254, %v2011
      %v2013 = vpop.f32.mrb[0].mxu0
      %v2014 = vpop.f32.mrb[0].mxu0
      %v2015 = vadd.f32 %v254, %v2014
      %v2016 = vpop.f32.mrb[0].mxu0
      %2017 = vmatprep.mubr.bf16.mxu0 0
      %2018 = vmatmul.mubr.bf16.gmra.mrb[0].mxu0 %v1871
      %v2019 = vpop.f32.mrb[0].mxu0
      %v2020 = vadd.f32 %v254, %v2019
      %v2021 = vpop.f32.mrb[0].mxu0
      %v2022 = vpop.f32.mrb[0].mxu0
      %v2023 = vadd.f32 %v254, %v2022
      %v2024 = vpop.f32.mrb[0].mxu0
      %2025 = vmatprep.mubr.bf16.mxu0 0
      %2026 = vmatmul.mubr.bf16.gmra.mrb[0].mxu0 %v1872
      %v2027 = vpop.f32.mrb[0].mxu0
      %v2028 = vadd.f32 %v254, %v2027
      %v2029 = vpop.f32.mrb[0].mxu0
      %v2030 = vpop.f32.mrb[0].mxu0
      %v2031 = vadd.f32 %v254, %v2030
      %v2032 = vpop.f32.mrb[0].mxu0
      %2033 = vdwg.mxu0
      %2034 = vst [vmem:[%s246] sm:$0xff] %v1972
      %2035 = vst [vmem:[%s246 + $0x8] sm:$0xff] %v1975
      %2036 = vst [vmem:[%s246 + $0x10] sm:$0xff] %v1980
      %2037 = vst [vmem:[%s246 + $0x18] sm:$0xff] %v1983
      %2038 = vst [vmem:[%s246 + $0x20] sm:$0xff] %v1988
      %2039 = vst [vmem:[%s246 + $0x28] sm:$0xff] %v1991
      %2040 = vst [vmem:[%s246 + $0x30] sm:$0xff] %v1996
      %2041 = vst [vmem:[%s246 + $0x38] sm:$0xff] %v1999
      %2042 = vst [vmem:[%s246 + $0x40] sm:$0xff] %v2004
      %2043 = vst [vmem:[%s246 + $0x48] sm:$0xff] %v2007
      %2044 = vst [vmem:[%s246 + $0x50] sm:$0xff] %v2012
      %2045 = vst [vmem:[%s246 + $0x58] sm:$0xff] %v2015
      %2046 = vst [vmem:[%s246 + $0x60] sm:$0xff] %v2020
      %2047 = vst [vmem:[%s246 + $0x68] sm:$0xff] %v2023
      %2048 = vst [vmem:[%s246 + $0x70] sm:$0xff] %v2028
      %2049 = vst [vmem:[%s246 + $0x78] sm:$0xff] %v2031
      %s2050 = smul.u32 16, %s16
      %p2051 = scmp.lt.s32.totalorder %s2050, 31
      %s2052 = scalar_select %p2051, %s2050, 31
      %s2053 = smul.addr %s2052, 8
      %s2054 = scalar_lea.vmem %s5, %s2053
      // Predicated region
      $region41: #{net_forward.1} parent=39 // pred_check
        %p2055 = pneg %p149
      $region42: #{net_forward.1} parent=39 // pred_check_branch
        %2057 = sbr.rel (%p2055) target = $region44
      $region43: #{net_forward.1} parent=39 // pred_region
        %s2058 = smul.u32 16, %s16
      $region44: #{net_forward.1} parent=39 // pred_fallthru
        _
    $region40: #{net_forward.1} parent=5 // pred_fallthru
      _
    %p2059 = scmp.le.s32.totalorder 2, %s11
    // Predicated region
    $region45: #{net_forward.1} parent=5 // pred_check
      %p2060 = pneg %p2059
    $region46: #{net_forward.1} parent=5 // pred_check_branch
      %2062 = sbr.rel (%p2060) target = $region48
    $region47: #{net_forward.1} parent=5 // pred_region
      %s2063 = ssub.s32 %s11, 2
      // Predicated region
      $region49: #{net_forward.1} parent=47 // pred_check
        %p2064 = pneg %p155
      $region50: #{net_forward.1} parent=47 // pred_check_branch
        %2066 = sbr.rel (%p2064) target = $region52
      $region51: #{net_forward.1} parent=47 // pred_region
        %s2067 = smul.u32 16, %s17
        %p2068 = scmp.lt.s32.totalorder %s2067, 31
        %s2069 = scalar_select %p2068, %s2067, 31
        %s2070 = smul.addr %s2069, 8
        %s2071 = scalar_lea.vmem %s5, %s2070
      $region52: #{net_forward.1} parent=47 // pred_fallthru
        _
    $region48: #{net_forward.1} parent=5 // pred_fallthru
      _
  $region6: #{net_forward.1} parent=0 // loop_footer
    %s15 = sadd.s32 1, %s11
  $region7: #{net_forward.1} parent=0 // loop_footer_branch
    %10 = sbr.rel target = $region3
  $region8: #{net_forward.1} parent=0 // loop_exit
    _

</llo_original>
